<compile_context>
chip_gen: v7x
topology: tpu7x:2x2x1
jax: 0.10.0
libtpu: 0.0.40
codegen_flags: <defaults>
</compile_context>

<pallas_src>
import functools

import jax
import jax.numpy as jnp
import numpy as np
from jax.experimental import pallas as pl
from jax.experimental.pallas import tpu as pltpu


# ---------------------------------------------------------------------------
# helpers
# ---------------------------------------------------------------------------
def _round_up(x, m):
    return (x + m - 1) // m * m


def _vmem_limit_bytes():
    """Per-generation scoped VMEM limit (v7x has only 64 MiB physical)."""
    try:
        cap = int(pltpu.get_tpu_info().vmem_capacity_bytes)
        return max(32 * 1024 * 1024, min(64 * 1024 * 1024, (3 * cap) // 4))
    except Exception:
        return 32 * 1024 * 1024


def _pick_tb(batch, per_image_rows, row_budget=4096):
    """Images per grid step: a few thousand GEMM rows, dividing the batch."""
    tb = max(1, min(batch, max(1, row_budget // per_image_rows)))
    while batch % tb:
        tb -= 1
    return tb


# ---------------------------------------------------------------------------
# Kernel A: conv1 (8x8 stride 4) as a GEMM on space-to-depth'd uint8 pixels.
# Input rows are the (Ho1+1)x(Wo1+1) space-to-depth grid (stride already
# removed), so the im2col of the resulting 2x2 stride-1 conv is just 4 shifted
# contiguous row-slices concatenated along lanes -- built entirely in VMEM.
# ---------------------------------------------------------------------------
def _conv1_kernel(x_ref, w_ref, b_ref, o_ref, *, wo1, n_rows):
    # uint8 -> bf16 on the VPU (0..255 is exact in bf16); cast once, slice 4x.
    x = x_ref[...].astype(jnp.float32).astype(jnp.bfloat16)
    pieces = []
    for a in range(2):
        for b in range(2):
            off = a * (wo1 + 1) + b
            pieces.append(x[off:off + n_rows, :])
    patches = jnp.concatenate(pieces, axis=-1)                  # (n_rows, 64*C)
    acc = jnp.dot(patches, w_ref[...], preferred_element_type=jnp.float32)
    y = jnp.maximum(acc + b_ref[...], 0.0).astype(o_ref.dtype)
    o_ref[:n_rows, :] = y
    o_ref[n_rows:, :] = jnp.zeros(
        (o_ref.shape[0] - n_rows, o_ref.shape[1]), o_ref.dtype)


def _conv1_call(x2d, w1, b1, *, batch, p1p, wo1):
    rows, cin = x2d.shape                      # rows = batch * p1p, cin = 16*C
    n_out = w1.shape[1]                        # 32
    tb = _pick_tb(batch, p1p)
    blk = tb * p1p
    n_rows = blk - (wo1 + 2)
    kern = functools.partial(_conv1_kernel, wo1=wo1, n_rows=n_rows)
    cost = pl.CostEstimate(
        flops=2 * rows * (4 * cin) * n_out, transcendentals=0,
        bytes_accessed=rows * cin + 4 * cin * n_out * 2 + rows * n_out * 2)
    return pl.pallas_call(
        kern,
        out_shape=jax.ShapeDtypeStruct((rows, n_out), jnp.bfloat16),
        grid_spec=pltpu.PrefetchScalarGridSpec(
            num_scalar_prefetch=0,
            grid=(batch // tb,),
            in_specs=[
                pl.BlockSpec((blk, cin), lambda i: (i, 0)),     # obs: streamed
                pl.BlockSpec((4 * cin, n_out), lambda i: (0, 0)),
                pl.BlockSpec((1, n_out), lambda i: (0, 0)),
            ],
            out_specs=pl.BlockSpec((blk, n_out), lambda i: (i, 0)),
        ),
        compiler_params=pltpu.CompilerParams(
            dimension_semantics=("parallel",),
            vmem_limit_bytes=_vmem_limit_bytes(),
        ),
        cost_estimate=cost,
    )(x2d, w1, b1)


# ---------------------------------------------------------------------------
# Kernel B: conv2 (4x4 s2) + conv3 (3x3 s1) fused.  Input rows are the
# (Ho2+1)x(Wo2+1) space-to-depth grid of the conv1 output (128 channels), so
# conv2 is a 2x2 stride-1 conv.  conv2's output stays in VMEM; conv3's im2col
# is 9 shifted row-slices of it.  Only conv3's small output goes back to HBM.
# ---------------------------------------------------------------------------
def _conv23_kernel(x_ref, w2_ref, b2_ref, w3_ref, b3_ref, o_ref, *, wo2, n2, n3):
    x = x_ref[...]                                               # (blk, 128) bf16
    pieces = []
    for a in range(2):
        for b in range(2):
            off = a * (wo2 + 1) + b
            pieces.append(x[off:off + n2, :])
    p2 = jnp.concatenate(pieces, axis=-1)                        # (n2, 512)
    acc2 = jnp.dot(p2, w2_ref[...], preferred_element_type=jnp.float32)
    y2 = jnp.maximum(acc2 + b2_ref[...], 0.0).astype(jnp.bfloat16)   # (n2, 64)

    pieces = []
    for kh in range(3):
        for kw in range(3):
            off = kh * (wo2 + 1) + kw
            pieces.append(y2[off:off + n3, :])
    p3 = jnp.concatenate(pieces, axis=-1)                        # (n3, 576)
    acc3 = jnp.dot(p3, w3_ref[...], preferred_element_type=jnp.float32)
    y3 = jnp.maximum(acc3 + b3_ref[...], 0.0).astype(o_ref.dtype)
    o_ref[:n3, :] = y3
    o_ref[n3:, :] = jnp.zeros((o_ref.shape[0] - n3, o_ref.shape[1]), o_ref.dtype)


def _conv23_call(y1s, w2, b2, w3, b3, *, batch, p2p, wo2):
    rows, cin = y1s.shape                      # rows = batch * p2p, cin = 128
    tb = _pick_tb(batch, p2p)
    blk = tb * p2p
    n2 = blk - (wo2 + 2)
    n3 = n2 - (2 * (wo2 + 1) + 2)
    kern = functools.partial(_conv23_kernel, wo2=wo2, n2=n2, n3=n3)
    cost = pl.CostEstimate(
        flops=2 * rows * (512 * 64 + 576 * 64), transcendentals=0,
        bytes_accessed=rows * cin * 2 + (512 + 576) * 64 * 2 + rows * 64 * 2)
    return pl.pallas_call(
        kern,
        out_shape=jax.ShapeDtypeStruct((rows, 64), jnp.bfloat16),
        grid_spec=pltpu.PrefetchScalarGridSpec(
            num_scalar_prefetch=0,
            grid=(batch // tb,),
            in_specs=[
                pl.BlockSpec((blk, cin), lambda i: (i, 0)),      # y1: streamed
                pl.BlockSpec((512, 64), lambda i: (0, 0)),
                pl.BlockSpec((1, 64), lambda i: (0, 0)),
                pl.BlockSpec((576, 64), lambda i: (0, 0)),
                pl.BlockSpec((1, 64), lambda i: (0, 0)),
            ],
            out_specs=pl.BlockSpec((blk, 64), lambda i: (i, 0)),
        ),
        compiler_params=pltpu.CompilerParams(
            dimension_semantics=("parallel",),
            vmem_limit_bytes=_vmem_limit_bytes(),
        ),
        cost_estimate=cost,
    )(y1s, w2, b2, w3, b3)


# ---------------------------------------------------------------------------
# Kernel C: final Linear + ReLU, tiled over (M, N) with N tile = 128 so the
# output stores are lane-dense and both grid axes can be megacore-sharded.
# ---------------------------------------------------------------------------
def _fc_kernel(a_ref, w_ref, b_ref, o_ref):
    acc = jnp.dot(a_ref[...], w_ref[...], preferred_element_type=jnp.float32)
    o_ref[...] = jnp.maximum(acc + b_ref[...], 0.0).astype(o_ref.dtype)


def _fc_call(a, w, b, *, block_m=512, block_n=128):
    M, K = a.shape
    _, N = w.shape
    tm = min(block_m, M)
    tn = min(block_n, N)
    b2d = b.reshape(1, N).astype(jnp.float32)
    cost = pl.CostEstimate(flops=2 * M * K * N, transcendentals=0,
                           bytes_accessed=M * K * 2 + K * N * 2 + M * N * 4)
    return pl.pallas_call(
        _fc_kernel,
        out_shape=jax.ShapeDtypeStruct((M, N), jnp.float32),
        grid_spec=pltpu.PrefetchScalarGridSpec(
            num_scalar_prefetch=0,
            grid=(pl.cdiv(M, tm), N // tn),
            in_specs=[
                pl.BlockSpec((tm, K), lambda i, j: (i, 0)),
                pl.BlockSpec((K, tn), lambda i, j: (0, j)),
                pl.BlockSpec((1, tn), lambda i, j: (0, j)),
            ],
            out_specs=pl.BlockSpec((tm, tn), lambda i, j: (i, j)),
        ),
        compiler_params=pltpu.CompilerParams(
            dimension_semantics=("parallel", "parallel"),
            vmem_limit_bytes=_vmem_limit_bytes(),
        ),
        cost_estimate=cost,
    )(a, w, b2d)


# ---------------------------------------------------------------------------
# NatureCNNEncoder forward (kernel path).  XLA glue is pure data movement
# (crop / space-to-depth / flatten) on raw uint8 pixels and the tiny conv
# outputs; all FLOPs run inside the three Pallas kernels.
# ---------------------------------------------------------------------------
def nature_cnn_encoder_forward(kparams, observations):
    B, H, W, C = observations.shape
    Ho1, Wo1 = (H - 8) // 4 + 1, (W - 8) // 4 + 1
    Ho2, Wo2 = (Ho1 - 4) // 2 + 1, (Wo1 - 4) // 2 + 1
    Ho3, Wo3 = Ho2 - 2, Wo2 - 2

    # --- conv1: crop + space-to-depth(4) the uint8 pixels, flatten per image.
    x = observations[:, :4 * (Ho1 + 1), :4 * (Wo1 + 1), :]
    x = x.reshape(B, Ho1 + 1, 4, Wo1 + 1, 4, C).transpose(0, 1, 3, 2, 4, 5)
    P1 = (Ho1 + 1) * (Wo1 + 1)
    P1p = _round_up(P1, 32)                    # keep row tiles DMA-aligned
    x = x.reshape(B, P1, 16 * C)
    if P1p != P1:
        x = jnp.pad(x, ((0, 0), (0, P1p - P1), (0, 0)))
    x = x.reshape(B * P1p, 16 * C)

    y1 = _conv1_call(x, kparams["w1"], kparams["b1"], batch=B, p1p=P1p, wo1=Wo1)

    # --- conv2 input: un-flatten, drop junk rows/cols, space-to-depth(2).
    y1 = y1.reshape(B, P1p, 32)[:, :P1, :].reshape(B, Ho1 + 1, Wo1 + 1, 32)
    y1 = y1[:, :2 * (Ho2 + 1), :2 * (Wo2 + 1), :]
    y1 = y1.reshape(B, Ho2 + 1, 2, Wo2 + 1, 2, 32).transpose(0, 1, 3, 2, 4, 5)
    P2 = (Ho2 + 1) * (Wo2 + 1)
    P2p = _round_up(P2, 32)
    y1 = y1.reshape(B, P2, 128)
    if P2p != P2:
        y1 = jnp.pad(y1, ((0, 0), (0, P2p - P2), (0, 0)))
    y1 = y1.reshape(B * P2p, 128)

    y3 = _conv23_call(y1, kparams["w2"], kparams["b2"], kparams["w3"],
                      kparams["b3"], batch=B, p2p=P2p, wo2=Wo2)

    # --- FC input: drop junk rows/cols, NHWC flatten (wfc rows pre-permuted).
    y3 = y3.reshape(B, P2p, 64)[:, :P2, :].reshape(B, Ho2 + 1, Wo2 + 1, 64)
    feat = y3[:, :Ho3, :Wo3, :].reshape(B, Ho3 * Wo3 * 64)

    return _fc_call(feat, kparams["wfc"], kparams["bfc"])           # (B, 256)


# ---------------------------------------------------------------------------
# One-time parameter preparation for the kernel path.
# ---------------------------------------------------------------------------
def prepare_kernel_params(params, obs_shape):
    _, H, W, C = obs_shape
    Ho1, Wo1 = (H - 8) // 4 + 1, (W - 8) // 4 + 1
    Ho2, Wo2 = (Ho1 - 4) // 2 + 1, (Wo1 - 4) // 2 + 1
    Ho3, Wo3 = Ho2 - 2, Wo2 - 2

    # conv1: fold /255 and permute rows (kh,kw,ci)->(a,b,ph,pw,ci), kh=4a+ph.
    w1 = params["w1"].astype(jnp.float32) * (1.0 / 255.0)
    w1p = (w1.reshape(2, 4, 2, 4, C, 32)
             .transpose(0, 2, 1, 3, 4, 5)
             .reshape(64 * C, 32)).astype(jnp.bfloat16)
    # conv2: permute rows (kh,kw,ci)->(a,b,ph,pw,ci), kh=2a+ph.
    w2p = (params["w2"].astype(jnp.float32)
             .reshape(2, 2, 2, 2, 32, 64)
             .transpose(0, 2, 1, 3, 4, 5)
             .reshape(512, 64)).astype(jnp.bfloat16)
    w3p = params["w3"].astype(jnp.bfloat16)             # rows already (kh,kw,ci)
    # FC: permute rows from NCHW flatten order to NHWC flatten order.
    n_out = params["wfc"].shape[1]
    wfc_nhwc = (params["wfc"].reshape(64, Ho3, Wo3, n_out)
                  .transpose(1, 2, 0, 3)
                  .reshape(Ho3 * Wo3 * 64, n_out)).astype(jnp.bfloat16)
    return {
        "w1": w1p, "b1": params["b1"].reshape(1, 32).astype(jnp.float32),
        "w2": w2p, "b2": params["b2"].reshape(1, 64).astype(jnp.float32),
        "w3": w3p, "b3": params["b3"].reshape(1, 64).astype(jnp.float32),
        "wfc": wfc_nhwc, "bfc": params["bfc"].astype(jnp.float32),
    }


# ---------------------------------------------------------------------------
# Pure-JAX reference (f32, matches the PyTorch module semantics).
# ---------------------------------------------------------------------------
def reference_forward(params, observations, c_in):
    x = observations.astype(jnp.float32) / 255.0

    def conv(x, w_flat, b, k, cin, cout, stride):
        w = w_flat.reshape(k, k, cin, cout)
        y = jax.lax.conv_general_dilated(
            x, w, (stride, stride), "VALID",
            dimension_numbers=("NHWC", "HWIO", "NHWC"),
            precision=jax.lax.Precision.HIGHEST)
        return jax.nn.relu(y + b)

    x = conv(x, params["w1"], params["b1"], 8, c_in, 32, 4)
    x = conv(x, params["w2"], params["b2"], 4, 32, 64, 2)
    x = conv(x, params["w3"], params["b3"], 3, 64, 64, 1)
    feat = jnp.transpose(x, (0, 3, 1, 2)).reshape(x.shape[0], -1)  # NCHW flatten
    y = jnp.dot(feat, params["wfc"], precision=jax.lax.Precision.HIGHEST)
    return jax.nn.relu(y + params["bfc"])


# ---------------------------------------------------------------------------
# Deterministic parameter construction (same shapes as the PyTorch module).
# ---------------------------------------------------------------------------
def init_params(key, c_in, n_flatten, feature_size=256):
    ks = jax.random.split(key, 8)

    def unif(k, shape, fan_in):
        bound = 1.0 / jnp.sqrt(float(fan_in))
        return jax.random.uniform(k, shape, jnp.float32, -bound, bound)

    return {
        # conv weights stored flattened as (kh*kw*cin, cout)
        "w1": unif(ks[0], (8 * 8 * c_in, 32), 8 * 8 * c_in),
        "b1": unif(ks[1], (32,), 8 * 8 * c_in),
        "w2": unif(ks[2], (4 * 4 * 32, 64), 4 * 4 * 32),
        "b2": unif(ks[3], (64,), 4 * 4 * 32),
        "w3": unif(ks[4], (3 * 3 * 64, 64), 3 * 3 * 64),
        "b3": unif(ks[5], (64,), 3 * 3 * 64),
        "wfc": unif(ks[6], (n_flatten, feature_size), n_flatten),
        "bfc": unif(ks[7], (feature_size,), n_flatten),
    }


if __name__ == "__main__":
    # 44x44 input: conv stack 44 -> 10 -> 4 -> 2, so the NCHW->NHWC flatten
    # permutation of wfc is actually exercised (n_flatten = 64*2*2 = 256).
    B, H, W, C = 2, 44, 44, 3

    key = jax.random.PRNGKey(0)
    k_obs, k_par = jax.random.split(key)

    obs = jax.random.randint(k_obs, (B, H, W, C), 0, 256, dtype=jnp.int32)
    obs = obs.astype(jnp.uint8)                   # image-like observations

    h1 = (H - 8) // 4 + 1
    h2 = (h1 - 4) // 2 + 1
    h3 = h2 - 2
    n_flatten = 64 * h3 * h3

    params = init_params(k_par, C, n_flatten)
    kparams = prepare_kernel_params(params, obs.shape)

    fwd = jax.jit(nature_cnn_encoder_forward)
    out = jax.block_until_ready(fwd(kparams, obs))

    ref = jax.block_until_ready(reference_forward(params, obs, C))

    assert out.shape == (B, 256), out.shape
    assert bool(jnp.all(jnp.isfinite(out)))
    max_err = float(jnp.max(jnp.abs(out - ref)))
    # bf16 weight/activation path vs f32 HIGHEST reference
    assert jnp.allclose(out, ref, atol=3e-2, rtol=3e-2), max_err

    print("KERNEL_OK")
</pallas_src>

<mosaic_0001>
module attributes {stable_mosaic.version = 11 : i64} {
  func.func @_conv1_kernel(%arg0: i32, %arg1: memref<256x48xi8, #tpu.memory_space<vmem>>, %arg2: memref<192x32xbf16, #tpu.memory_space<vmem>>, %arg3: memref<1x32xf32, #tpu.memory_space<vmem>>, %arg4: memref<256x32xbf16, #tpu.memory_space<vmem>>) attributes {dimension_semantics = [#tpu.dimension_semantics<parallel>], iteration_bounds = array<i64: 1>, scalar_prefetch = 0 : i64, scratch_operands = 0 : i64, tpu.core_type = #tpu.core_type<tc>, window_params = [{transform_indices = @transform_0, window_bounds = array<i64: 256, 48>}, {pipeline_mode = #tpu.pipeline_mode<synchronous>, transform_indices = @transform_1, window_bounds = array<i64: 192, 32>}, {pipeline_mode = #tpu.pipeline_mode<synchronous>, transform_indices = @transform_2, window_bounds = array<i64: 1, 32>}, {transform_indices = @transform_3, window_bounds = array<i64: 256, 32>}]} {
    %c0 = arith.constant 0 : index
    %c0_0 = arith.constant 0 : index
    %0 = vector.load %arg1[%c0, %c0_0] : memref<256x48xi8, #tpu.memory_space<vmem>>, vector<256x48xi8>
    %1 = arith.uitofp %0 : vector<256x48xi8> to vector<256x48xf32>
    %2 = arith.truncf %1 : vector<256x48xf32> to vector<256x48xbf16>
    %3 = vector.extract_strided_slice %2 {offsets = [0, 0], sizes = [244, 48], strides = [1, 1]} : vector<256x48xbf16> to vector<244x48xbf16>
    %4 = vector.extract_strided_slice %2 {offsets = [1, 0], sizes = [244, 48], strides = [1, 1]} : vector<256x48xbf16> to vector<244x48xbf16>
    %5 = vector.extract_strided_slice %2 {offsets = [11, 0], sizes = [244, 48], strides = [1, 1]} : vector<256x48xbf16> to vector<244x48xbf16>
    %6 = vector.extract_strided_slice %2 {offsets = [12, 0], sizes = [244, 48], strides = [1, 1]} : vector<256x48xbf16> to vector<244x48xbf16>
    %7 = tpu.concatenate %3, %4, %5, %6 in 1 : vector<244x48xbf16>, vector<244x48xbf16>, vector<244x48xbf16>, vector<244x48xbf16> -> vector<244x192xbf16>
    %c0_1 = arith.constant 0 : index
    %c0_2 = arith.constant 0 : index
    %8 = vector.load %arg2[%c0_1, %c0_2] : memref<192x32xbf16, #tpu.memory_space<vmem>>, vector<192x32xbf16>
    %cst = arith.constant dense<0.000000e+00> : vector<244x32xf32>
    %9 = tpu.matmul %7, %8, %cst {dimension_numbers = #tpu.dot_dimension_numbers<[1], [0], [0], [1], [0, 0, 1, 1], [], []>} : vector<244x192xbf16>, vector<192x32xbf16>, vector<244x32xf32> -> vector<244x32xf32>
    %c0_3 = arith.constant 0 : index
    %c0_4 = arith.constant 0 : index
    %10 = vector.load %arg3[%c0_3, %c0_4] : memref<1x32xf32, #tpu.memory_space<vmem>>, vector<1x32xf32>
    %11 = vector.broadcast %10 : vector<1x32xf32> to vector<244x32xf32>
    %12 = arith.addf %9, %11 : vector<244x32xf32>
    %cst_5 = arith.constant 0.000000e+00 : f32
    %13 = vector.broadcast %cst_5 : f32 to vector<244x32xf32>
    %14 = arith.maximumf %12, %13 : vector<244x32xf32>
    %15 = arith.truncf %14 : vector<244x32xf32> to vector<244x32xbf16>
    %c0_6 = arith.constant 0 : index
    %c0_7 = arith.constant 0 : index
    %16 = vector.load %arg4[%c0_6, %c0_7] : memref<256x32xbf16, #tpu.memory_space<vmem>>, vector<244x32xbf16>
    tpu.vector_store %arg4[%c0_6, %c0_7], %15 {strides = array<i32>} : memref<256x32xbf16, #tpu.memory_space<vmem>>, vector<244x32xbf16>,
    %cst_8 = arith.constant 0.000000e+00 : bf16
    %17 = vector.broadcast %cst_8 : bf16 to vector<12x32xbf16>
    %c244 = arith.constant 244 : index
    %c0_9 = arith.constant 0 : index
    %18 = vector.load %arg4[%c244, %c0_9] : memref<256x32xbf16, #tpu.memory_space<vmem>>, vector<12x32xbf16>
    tpu.vector_store %arg4[%c244, %c0_9], %17 {strides = array<i32>} : memref<256x32xbf16, #tpu.memory_space<vmem>>, vector<12x32xbf16>,
    return
  }
  func.func @transform_0(%arg0: i32) -> (i32, i32) {
    %c0_i32 = arith.constant 0 : i32
    %c0_i32_0 = arith.constant 0 : i32
    return %arg0, %c0_i32 : i32, i32
  }
  func.func @transform_1(%arg0: i32) -> (i32, i32) {
    %c0_i32 = arith.constant 0 : i32
    %c0_i32_0 = arith.constant 0 : i32
    %c0_i32_1 = arith.constant 0 : i32
    return %c0_i32, %c0_i32_0 : i32, i32
  }
  func.func @transform_2(%arg0: i32) -> (i32, i32) {
    %c0_i32 = arith.constant 0 : i32
    %c0_i32_0 = arith.constant 0 : i32
    %c0_i32_1 = arith.constant 0 : i32
    return %c0_i32, %c0_i32_0 : i32, i32
  }
  func.func @transform_3(%arg0: i32) -> (i32, i32) {
    %c0_i32 = arith.constant 0 : i32
    %c0_i32_0 = arith.constant 0 : i32
    return %arg0, %c0_i32 : i32, i32
  }
}

module attributes {stable_mosaic.version = 11 : i64} {
  func.func @_conv23_kernel(%arg0: i32, %arg1: memref<64x128xbf16, #tpu.memory_space<vmem>>, %arg2: memref<512x64xbf16, #tpu.memory_space<vmem>>, %arg3: memref<1x64xf32, #tpu.memory_space<vmem>>, %arg4: memref<576x64xbf16, #tpu.memory_space<vmem>>, %arg5: memref<1x64xf32, #tpu.memory_space<vmem>>, %arg6: memref<64x64xbf16, #tpu.memory_space<vmem>>) attributes {dimension_semantics = [#tpu.dimension_semantics<parallel>], iteration_bounds = array<i64: 1>, scalar_prefetch = 0 : i64, scratch_operands = 0 : i64, tpu.core_type = #tpu.core_type<tc>, window_params = [{transform_indices = @transform_0, window_bounds = array<i64: 64, 128>}, {pipeline_mode = #tpu.pipeline_mode<synchronous>, transform_indices = @transform_1, window_bounds = array<i64: 512, 64>}, {pipeline_mode = #tpu.pipeline_mode<synchronous>, transform_indices = @transform_2, window_bounds = array<i64: 1, 64>}, {pipeline_mode = #tpu.pipeline_mode<synchronous>, transform_indices = @transform_3, window_bounds = array<i64: 576, 64>}, {pipeline_mode = #tpu.pipeline_mode<synchronous>, transform_indices = @transform_4, window_bounds = array<i64: 1, 64>}, {transform_indices = @transform_5, window_bounds = array<i64: 64, 64>}]} {
    %c0 = arith.constant 0 : index
    %c0_0 = arith.constant 0 : index
    %0 = vector.load %arg1[%c0, %c0_0] : memref<64x128xbf16, #tpu.memory_space<vmem>>, vector<64x128xbf16>
    %1 = vector.extract_strided_slice %0 {offsets = [0, 0], sizes = [58, 128], strides = [1, 1]} : vector<64x128xbf16> to vector<58x128xbf16>
    %2 = vector.extract_strided_slice %0 {offsets = [1, 0], sizes = [58, 128], strides = [1, 1]} : vector<64x128xbf16> to vector<58x128xbf16>
    %3 = vector.extract_strided_slice %0 {offsets = [5, 0], sizes = [58, 128], strides = [1, 1]} : vector<64x128xbf16> to vector<58x128xbf16>
    %4 = vector.extract_strided_slice %0 {offsets = [6, 0], sizes = [58, 128], strides = [1, 1]} : vector<64x128xbf16> to vector<58x128xbf16>
    %5 = tpu.concatenate %1, %2, %3, %4 in 1 : vector<58x128xbf16>, vector<58x128xbf16>, vector<58x128xbf16>, vector<58x128xbf16> -> vector<58x512xbf16>
    %c0_1 = arith.constant 0 : index
    %c0_2 = arith.constant 0 : index
    %6 = vector.load %arg2[%c0_1, %c0_2] : memref<512x64xbf16, #tpu.memory_space<vmem>>, vector<512x64xbf16>
    %cst = arith.constant dense<0.000000e+00> : vector<58x64xf32>
    %7 = tpu.matmul %5, %6, %cst {dimension_numbers = #tpu.dot_dimension_numbers<[1], [0], [0], [1], [0, 0, 1, 1], [], []>} : vector<58x512xbf16>, vector<512x64xbf16>, vector<58x64xf32> -> vector<58x64xf32>
    %c0_3 = arith.constant 0 : index
    %c0_4 = arith.constant 0 : index
    %8 = vector.load %arg3[%c0_3, %c0_4] : memref<1x64xf32, #tpu.memory_space<vmem>>, vector<1x64xf32>
    %9 = vector.broadcast %8 : vector<1x64xf32> to vector<58x64xf32>
    %10 = arith.addf %7, %9 : vector<58x64xf32>
    %cst_5 = arith.constant 0.000000e+00 : f32
    %11 = vector.broadcast %cst_5 : f32 to vector<58x64xf32>
    %12 = arith.maximumf %10, %11 : vector<58x64xf32>
    %13 = arith.truncf %12 : vector<58x64xf32> to vector<58x64xbf16>
    %14 = vector.extract_strided_slice %13 {offsets = [0, 0], sizes = [46, 64], strides = [1, 1]} : vector<58x64xbf16> to vector<46x64xbf16>
    %15 = vector.extract_strided_slice %13 {offsets = [1, 0], sizes = [46, 64], strides = [1, 1]} : vector<58x64xbf16> to vector<46x64xbf16>
    %16 = vector.extract_strided_slice %13 {offsets = [2, 0], sizes = [46, 64], strides = [1, 1]} : vector<58x64xbf16> to vector<46x64xbf16>
    %17 = vector.extract_strided_slice %13 {offsets = [5, 0], sizes = [46, 64], strides = [1, 1]} : vector<58x64xbf16> to vector<46x64xbf16>
    %18 = vector.extract_strided_slice %13 {offsets = [6, 0], sizes = [46, 64], strides = [1, 1]} : vector<58x64xbf16> to vector<46x64xbf16>
    %19 = vector.extract_strided_slice %13 {offsets = [7, 0], sizes = [46, 64], strides = [1, 1]} : vector<58x64xbf16> to vector<46x64xbf16>
    %20 = vector.extract_strided_slice %13 {offsets = [10, 0], sizes = [46, 64], strides = [1, 1]} : vector<58x64xbf16> to vector<46x64xbf16>
    %21 = vector.extract_strided_slice %13 {offsets = [11, 0], sizes = [46, 64], strides = [1, 1]} : vector<58x64xbf16> to vector<46x64xbf16>
    %22 = vector.extract_strided_slice %13 {offsets = [12, 0], sizes = [46, 64], strides = [1, 1]} : vector<58x64xbf16> to vector<46x64xbf16>
    %23 = tpu.concatenate %14, %15, %16, %17, %18, %19, %20, %21, %22 in 1 : vector<46x64xbf16>, vector<46x64xbf16>, vector<46x64xbf16>, vector<46x64xbf16>, vector<46x64xbf16>, vector<46x64xbf16>, vector<46x64xbf16>, vector<46x64xbf16>, vector<46x64xbf16> -> vector<46x576xbf16>
    %c0_6 = arith.constant 0 : index
    %c0_7 = arith.constant 0 : index
    %24 = vector.load %arg4[%c0_6, %c0_7] : memref<576x64xbf16, #tpu.memory_space<vmem>>, vector<576x64xbf16>
    %cst_8 = arith.constant dense<0.000000e+00> : vector<46x64xf32>
    %25 = tpu.matmul %23, %24, %cst_8 {dimension_numbers = #tpu.dot_dimension_numbers<[1], [0], [0], [1], [0, 0, 1, 1], [], []>} : vector<46x576xbf16>, vector<576x64xbf16>, vector<46x64xf32> -> vector<46x64xf32>
    %c0_9 = arith.constant 0 : index
    %c0_10 = arith.constant 0 : index
    %26 = vector.load %arg5[%c0_9, %c0_10] : memref<1x64xf32, #tpu.memory_space<vmem>>, vector<1x64xf32>
    %27 = vector.broadcast %26 : vector<1x64xf32> to vector<46x64xf32>
    %28 = arith.addf %25, %27 : vector<46x64xf32>
    %cst_11 = arith.constant 0.000000e+00 : f32
    %29 = vector.broadcast %cst_11 : f32 to vector<46x64xf32>
    %30 = arith.maximumf %28, %29 : vector<46x64xf32>
    %31 = arith.truncf %30 : vector<46x64xf32> to vector<46x64xbf16>
    %c0_12 = arith.constant 0 : index
    %c0_13 = arith.constant 0 : index
    %32 = vector.load %arg6[%c0_12, %c0_13] : memref<64x64xbf16, #tpu.memory_space<vmem>>, vector<46x64xbf16>
    tpu.vector_store %arg6[%c0_12, %c0_13], %31 {strides = array<i32>} : memref<64x64xbf16, #tpu.memory_space<vmem>>, vector<46x64xbf16>,
    %cst_14 = arith.constant 0.000000e+00 : bf16
    %33 = vector.broadcast %cst_14 : bf16 to vector<18x64xbf16>
    %c46 = arith.constant 46 : index
    %c0_15 = arith.constant 0 : index
    %34 = vector.load %arg6[%c46, %c0_15] : memref<64x64xbf16, #tpu.memory_space<vmem>>, vector<18x64xbf16>
    tpu.vector_store %arg6[%c46, %c0_15], %33 {strides = array<i32>} : memref<64x64xbf16, #tpu.memory_space<vmem>>, vector<18x64xbf16>,
    return
  }
  func.func @transform_0(%arg0: i32) -> (i32, i32) {
    %c0_i32 = arith.constant 0 : i32
    %c0_i32_0 = arith.constant 0 : i32
    return %arg0, %c0_i32 : i32, i32
  }
  func.func @transform_1(%arg0: i32) -> (i32, i32) {
    %c0_i32 = arith.constant 0 : i32
    %c0_i32_0 = arith.constant 0 : i32
    %c0_i32_1 = arith.constant 0 : i32
    return %c0_i32, %c0_i32_0 : i32, i32
  }
  func.func @transform_2(%arg0: i32) -> (i32, i32) {
    %c0_i32 = arith.constant 0 : i32
    %c0_i32_0 = arith.constant 0 : i32
    %c0_i32_1 = arith.constant 0 : i32
    return %c0_i32, %c0_i32_0 : i32, i32
  }
  func.func @transform_3(%arg0: i32) -> (i32, i32) {
    %c0_i32 = arith.constant 0 : i32
    %c0_i32_0 = arith.constant 0 : i32
    %c0_i32_1 = arith.constant 0 : i32
    return %c0_i32, %c0_i32_0 : i32, i32
  }
  func.func @transform_4(%arg0: i32) -> (i32, i32) {
    %c0_i32 = arith.constant 0 : i32
    %c0_i32_0 = arith.constant 0 : i32
    %c0_i32_1 = arith.constant 0 : i32
    return %c0_i32, %c0_i32_0 : i32, i32
  }
  func.func @transform_5(%arg0: i32) -> (i32, i32) {
    %c0_i32 = arith.constant 0 : i32
    %c0_i32_0 = arith.constant 0 : i32
    return %arg0, %c0_i32 : i32, i32
  }
}

module attributes {stable_mosaic.version = 11 : i64} {
  func.func @_fc_kernel(%arg0: i32, %arg1: i32, %arg2: memref<2x256xbf16, #tpu.memory_space<vmem>>, %arg3: memref<256x128xbf16, #tpu.memory_space<vmem>>, %arg4: memref<1x128xf32, #tpu.memory_space<vmem>>, %arg5: memref<2x128xf32, #tpu.memory_space<vmem>>) attributes {dimension_semantics = [#tpu.dimension_semantics<parallel>, #tpu.dimension_semantics<parallel>], iteration_bounds = array<i64: 1, 2>, scalar_prefetch = 0 : i64, scratch_operands = 0 : i64, tpu.core_type = #tpu.core_type<tc>, window_params = [{transform_indices = @transform_0, window_bounds = array<i64: 2, 256>}, {transform_indices = @transform_1, window_bounds = array<i64: 256, 128>}, {transform_indices = @transform_2, window_bounds = array<i64: 1, 128>}, {transform_indices = @transform_3, window_bounds = array<i64: 2, 128>}]} {
    %c0 = arith.constant 0 : index
    %c0_0 = arith.constant 0 : index
    %0 = vector.load %arg2[%c0, %c0_0] : memref<2x256xbf16, #tpu.memory_space<vmem>>, vector<2x256xbf16>
    %c0_1 = arith.constant 0 : index
    %c0_2 = arith.constant 0 : index
    %1 = vector.load %arg3[%c0_1, %c0_2] : memref<256x128xbf16, #tpu.memory_space<vmem>>, vector<256x128xbf16>
    %cst = arith.constant dense<0.000000e+00> : vector<2x128xf32>
    %2 = tpu.matmul %0, %1, %cst {dimension_numbers = #tpu.dot_dimension_numbers<[1], [0], [0], [1], [0, 0, 1, 1], [], []>} : vector<2x256xbf16>, vector<256x128xbf16>, vector<2x128xf32> -> vector<2x128xf32>
    %c0_3 = arith.constant 0 : index
    %c0_4 = arith.constant 0 : index
    %3 = vector.load %arg4[%c0_3, %c0_4] : memref<1x128xf32, #tpu.memory_space<vmem>>, vector<1x128xf32>
    %4 = vector.broadcast %3 : vector<1x128xf32> to vector<2x128xf32>
    %5 = arith.addf %2, %4 : vector<2x128xf32>
    %cst_5 = arith.constant 0.000000e+00 : f32
    %6 = vector.broadcast %cst_5 : f32 to vector<2x128xf32>
    %7 = arith.maximumf %5, %6 : vector<2x128xf32>
    %c0_6 = arith.constant 0 : index
    %c0_7 = arith.constant 0 : index
    %8 = vector.load %arg5[%c0_6, %c0_7] : memref<2x128xf32, #tpu.memory_space<vmem>>, vector<2x128xf32>
    tpu.vector_store %arg5[%c0_6, %c0_7], %7 {strides = array<i32>} : memref<2x128xf32, #tpu.memory_space<vmem>>, vector<2x128xf32>,
    return
  }
  func.func @transform_0(%arg0: i32, %arg1: i32) -> (i32, i32) {
    %c0_i32 = arith.constant 0 : i32
    %c0_i32_0 = arith.constant 0 : i32
    return %arg0, %c0_i32 : i32, i32
  }
  func.func @transform_1(%arg0: i32, %arg1: i32) -> (i32, i32) {
    %c0_i32 = arith.constant 0 : i32
    %c0_i32_0 = arith.constant 0 : i32
    return %c0_i32, %arg1 : i32, i32
  }
  func.func @transform_2(%arg0: i32, %arg1: i32) -> (i32, i32) {
    %c0_i32 = arith.constant 0 : i32
    %c0_i32_0 = arith.constant 0 : i32
    return %c0_i32, %arg1 : i32, i32
  }
  func.func @transform_3(%arg0: i32, %arg1: i32) -> (i32, i32) {
    %c0_i32 = arith.constant 0 : i32
    return %arg0, %arg1 : i32, i32
  }
}

</mosaic_0001>

<llo_original>
// kernel: nature_cnn_encoder_forward.3
$region0: #{nature_cnn_encoder_forward.3}
  #allocation0 [shape = 'u32[]', space=smem, size = 0x4, offset = 0x4, fixed_abs, tag = 'smem constant byte address 0x4 - core index']
  #allocation1 [shape = 'u32[144,128]{1,0:T(1,128)}', space=vmem, size = 0x12000, scoped, tag = 'internal scratch']
  %s0 = inlined_call_operand.vmem [shape: u8[256,48], index: 0, kind: input, shape index: {}]
  %s1 = inlined_call_operand.vmem [shape: bf16[192,32], index: 1, kind: input, shape index: {}]
  %s2 = inlined_call_operand.vmem [shape: f32[1,32], index: 2, kind: input, shape index: {}]
  %s3 = inlined_call_operand.vmem [shape: bf16[256,32], index: 3, kind: output, shape index: {}]
  %s4 = sld [smem:[#allocation0]]
  $region22: #{nature_cnn_encoder_forward.3} parent=0
    _
  %s6 = ssub.s32 1, %s4
  %s7 = scalar_select 0, %s6, %s4
  // Predicated region
  $region2: #{nature_cnn_encoder_forward.3} parent=0 // pred_check
    _
  $region3: #{nature_cnn_encoder_forward.3} parent=0 // pred_check_branch
    %9 = sbr.rel (0) target = $region5
  $region4: #{nature_cnn_encoder_forward.3} parent=0 // pred_region
    _
  $region5: #{nature_cnn_encoder_forward.3} parent=0 // pred_fallthru
    _
  // Predicated region
  $region6: #{nature_cnn_encoder_forward.3} parent=0 // pred_check
    _
  $region7: #{nature_cnn_encoder_forward.3} parent=0 // pred_check_branch
    %11 = sbr.rel (0) target = $region9
  $region8: #{nature_cnn_encoder_forward.3} parent=0 // pred_region
    _
  $region9: #{nature_cnn_encoder_forward.3} parent=0 // pred_fallthru
    _
  // Predicated region
  $region10: #{nature_cnn_encoder_forward.3} parent=0 // pred_check
    _
  $region11: #{nature_cnn_encoder_forward.3} parent=0 // pred_check_branch
    %13 = sbr.rel (0) target = $region13
  $region12: #{nature_cnn_encoder_forward.3} parent=0 // pred_region
    _
  $region13: #{nature_cnn_encoder_forward.3} parent=0 // pred_fallthru
    _
  %v15 = vld [vmem:[%s0] sm:$0xff]
  %v16 = vld [vmem:[%s0 + $0x8] sm:$0xff]
  %v17 = vld [vmem:[%s0 + $0x10] sm:$0xff]
  %v18 = vld [vmem:[%s0 + $0x18] sm:$0xff]
  %v19 = vld [vmem:[%s0 + $0x20] sm:$0xff]
  %v20 = vld [vmem:[%s0 + $0x28] sm:$0xff]
  %v21 = vld [vmem:[%s0 + $0x30] sm:$0xff]
  %v22 = vld [vmem:[%s0 + $0x38] sm:$0xff]
  %v23 = vunpack.c.l.u8.bf16 %v15
  %v24 = vunpack.c.h.u8.bf16 %v15
  %v25 = vunpack.c.l.u8.bf16 %v16
  %v26 = vunpack.c.h.u8.bf16 %v16
  %v27 = vunpack.c.l.u8.bf16 %v17
  %v28 = vunpack.c.h.u8.bf16 %v17
  %v29 = vunpack.c.l.u8.bf16 %v18
  %v30 = vunpack.c.h.u8.bf16 %v18
  %v31 = vunpack.c.l.u8.bf16 %v19
  %v32 = vunpack.c.h.u8.bf16 %v19
  %v33 = vunpack.c.l.u8.bf16 %v20
  %v34 = vunpack.c.h.u8.bf16 %v20
  %v35 = vunpack.c.l.u8.bf16 %v21
  %v36 = vunpack.c.h.u8.bf16 %v21
  %v37 = vunpack.c.l.u8.bf16 %v22
  %v38 = vunpack.c.h.u8.bf16 %v22
  %vm39 = vsmask.f32 7424
  %v41 = vshrl.u32 %v23, 16
  %v43 = vshll.u32 %v23, 16
  %v45 = vrot.slane %v43, 1
  %v46 = vor.u32 %v41, %v45
  %v48 = vshll.u32 %v24, 16
  %v50 = vrot.slane %v48, 1
  %v51 = vsel %vm39, %v46, %v50
  %v52 = vshrl.u32 %v24, 16
  %v54 = vor.u32 %v52, %v50
  %v56 = vshll.u32 %v25, 16
  %v58 = vrot.slane %v56, 1
  %v59 = vsel %vm39, %v54, %v58
  %v60 = vshrl.u32 %v25, 16
  %v62 = vor.u32 %v60, %v58
  %v64 = vshll.u32 %v26, 16
  %v66 = vrot.slane %v64, 1
  %v67 = vsel %vm39, %v62, %v66
  %v68 = vshrl.u32 %v26, 16
  %v70 = vor.u32 %v68, %v66
  %v72 = vshll.u32 %v27, 16
  %v74 = vrot.slane %v72, 1
  %v75 = vsel %vm39, %v70, %v74
  %v76 = vshrl.u32 %v27, 16
  %v78 = vor.u32 %v76, %v74
  %v80 = vshll.u32 %v28, 16
  %v82 = vrot.slane %v80, 1
  %v83 = vsel %vm39, %v78, %v82
  %v84 = vshrl.u32 %v28, 16
  %v86 = vor.u32 %v84, %v82
  %v88 = vshll.u32 %v29, 16
  %v90 = vrot.slane %v88, 1
  %v91 = vsel %vm39, %v86, %v90
  %v92 = vshrl.u32 %v29, 16
  %v94 = vor.u32 %v92, %v90
  %v96 = vshll.u32 %v30, 16
  %v98 = vrot.slane %v96, 1
  %v99 = vsel %vm39, %v94, %v98
  %v100 = vshrl.u32 %v30, 16
  %v102 = vor.u32 %v100, %v98
  %v104 = vshll.u32 %v31, 16
  %v106 = vrot.slane %v104, 1
  %v107 = vsel %vm39, %v102, %v106
  %v108 = vshrl.u32 %v31, 16
  %v110 = vor.u32 %v108, %v106
  %v112 = vshll.u32 %v32, 16
  %v114 = vrot.slane %v112, 1
  %v115 = vsel %vm39, %v110, %v114
  %v116 = vshrl.u32 %v32, 16
  %v118 = vor.u32 %v116, %v114
  %v120 = vshll.u32 %v33, 16
  %v122 = vrot.slane %v120, 1
  %v123 = vsel %vm39, %v118, %v122
  %v124 = vshrl.u32 %v33, 16
  %v126 = vor.u32 %v124, %v122
  %v128 = vshll.u32 %v34, 16
  %v130 = vrot.slane %v128, 1
  %v131 = vsel %vm39, %v126, %v130
  %v132 = vshrl.u32 %v34, 16
  %v134 = vor.u32 %v132, %v130
  %v136 = vshll.u32 %v35, 16
  %v138 = vrot.slane %v136, 1
  %v139 = vsel %vm39, %v134, %v138
  %v140 = vshrl.u32 %v35, 16
  %v142 = vor.u32 %v140, %v138
  %v144 = vshll.u32 %v36, 16
  %v146 = vrot.slane %v144, 1
  %v147 = vsel %vm39, %v142, %v146
  %v148 = vshrl.u32 %v36, 16
  %v150 = vor.u32 %v148, %v146
  %v152 = vshll.u32 %v37, 16
  %v154 = vrot.slane %v152, 1
  %v155 = vsel %vm39, %v150, %v154
  %v156 = vshrl.u32 %v37, 16
  %v158 = vor.u32 %v156, %v154
  %v160 = vshll.u32 %v38, 16
  %v162 = vrot.slane %v160, 1
  %v163 = vsel %vm39, %v158, %v162
  %v164 = vshrl.u32 %v38, 16
  %v166 = vor.u32 %v164, %v162
  %167 = vrot.lane.b32.xlu0 %v51, 48
  %v168 = vpop.permute.xlu0 %167
  %169 = vrot.lane.b32.xlu0 %v59, 48
  %v170 = vpop.permute.xlu0 %169
  %171 = vrot.lane.b32.xlu0 %v67, 48
  %v172 = vpop.permute.xlu0 %171
  %173 = vrot.lane.b32.xlu0 %v75, 48
  %v174 = vpop.permute.xlu0 %173
  %175 = vrot.lane.b32.xlu0 %v83, 48
  %v176 = vpop.permute.xlu0 %175
  %177 = vrot.lane.b32.xlu0 %v91, 48
  %v178 = vpop.permute.xlu0 %177
  %179 = vrot.lane.b32.xlu0 %v99, 48
  %v180 = vpop.permute.xlu0 %179
  %181 = vrot.lane.b32.xlu0 %v107, 48
  %v182 = vpop.permute.xlu0 %181
  %183 = vrot.lane.b32.xlu0 %v115, 48
  %v184 = vpop.permute.xlu0 %183
  %185 = vrot.lane.b32.xlu0 %v123, 48
  %v186 = vpop.permute.xlu0 %185
  %187 = vrot.lane.b32.xlu0 %v131, 48
  %v188 = vpop.permute.xlu0 %187
  %189 = vrot.lane.b32.xlu0 %v139, 48
  %v190 = vpop.permute.xlu0 %189
  %191 = vrot.lane.b32.xlu0 %v147, 48
  %v192 = vpop.permute.xlu0 %191
  %193 = vrot.lane.b32.xlu0 %v155, 48
  %v194 = vpop.permute.xlu0 %193
  %195 = vrot.lane.b32.xlu0 %v163, 48
  %v196 = vpop.permute.xlu0 %195
  %197 = vrot.lane.b32.xlu0 %v166, 48
  %v198 = vpop.permute.xlu0 %197
  %vm199 = vsmask.f32 2304
  %v200 = vrot.slane %v41, 5
  %v201 = vrot.slane %v43, 6
  %v202 = vor.u32 %v200, %v201
  %v203 = vrot.slane %v52, 5
  %v204 = vrot.slane %v48, 6
  %v205 = vor.u32 %v203, %v204
  %v206 = vsel %vm199, %v202, %v205
  %v207 = vrot.slane %v60, 5
  %v208 = vrot.slane %v56, 6
  %v209 = vor.u32 %v207, %v208
  %v210 = vsel %vm199, %v205, %v209
  %v211 = vrot.slane %v68, 5
  %v212 = vrot.slane %v64, 6
  %v213 = vor.u32 %v211, %v212
  %v214 = vsel %vm199, %v209, %v213
  %v215 = vrot.slane %v76, 5
  %v216 = vrot.slane %v72, 6
  %v217 = vor.u32 %v215, %v216
  %v218 = vsel %vm199, %v213, %v217
  %v219 = vrot.slane %v84, 5
  %v220 = vrot.slane %v80, 6
  %v221 = vor.u32 %v219, %v220
  %v222 = vsel %vm199, %v217, %v221
  %v223 = vrot.slane %v92, 5
  %v224 = vrot.slane %v88, 6
  %v225 = vor.u32 %v223, %v224
  %v226 = vsel %vm199, %v221, %v225
  %v227 = vrot.slane %v100, 5
  %v228 = vrot.slane %v96, 6
  %v229 = vor.u32 %v227, %v228
  %v230 = vsel %vm199, %v225, %v229
  %v231 = vrot.slane %v108, 5
  %v232 = vrot.slane %v104, 6
  %v233 = vor.u32 %v231, %v232
  %v234 = vsel %vm199, %v229, %v233
  %v235 = vrot.slane %v116, 5
  %v236 = vrot.slane %v112, 6
  %v237 = vor.u32 %v235, %v236
  %v238 = vsel %vm199, %v233, %v237
  %v239 = vrot.slane %v124, 5
  %v240 = vrot.slane %v120, 6
  %v241 = vor.u32 %v239, %v240
  %v242 = vsel %vm199, %v237, %v241
  %v243 = vrot.slane %v132, 5
  %v244 = vrot.slane %v128, 6
  %v245 = vor.u32 %v243, %v244
  %v246 = vsel %vm199, %v241, %v245
  %v247 = vrot.slane %v140, 5
  %v248 = vrot.slane %v136, 6
  %v249 = vor.u32 %v247, %v248
  %v250 = vsel %vm199, %v245, %v249
  %v251 = vrot.slane %v148, 5
  %v252 = vrot.slane %v144, 6
  %v253 = vor.u32 %v251, %v252
  %v254 = vsel %vm199, %v249, %v253
  %v255 = vrot.slane %v156, 5
  %v256 = vrot.slane %v152, 6
  %v257 = vor.u32 %v255, %v256
  %v258 = vsel %vm199, %v253, %v257
  %v259 = vrot.slane %v164, 5
  %v260 = vrot.slane %v160, 6
  %v261 = vor.u32 %v259, %v260
  %v262 = vsel %vm199, %v257, %v261
  %263 = vrot.lane.b32.xlu0 %v206, 96
  %v264 = vpop.permute.xlu0 %263
  %265 = vrot.lane.b32.xlu0 %v210, 96
  %v266 = vpop.permute.xlu0 %265
  %267 = vrot.lane.b32.xlu0 %v214, 96
  %v268 = vpop.permute.xlu0 %267
  %269 = vrot.lane.b32.xlu0 %v218, 96
  %v270 = vpop.permute.xlu0 %269
  %271 = vrot.lane.b32.xlu0 %v222, 96
  %v272 = vpop.permute.xlu0 %271
  %273 = vrot.lane.b32.xlu0 %v226, 96
  %v274 = vpop.permute.xlu0 %273
  %275 = vrot.lane.b32.xlu0 %v230, 96
  %v276 = vpop.permute.xlu0 %275
  %277 = vrot.lane.b32.xlu0 %v234, 96
  %v278 = vpop.permute.xlu0 %277
  %279 = vrot.lane.b32.xlu0 %v238, 96
  %v280 = vpop.permute.xlu0 %279
  %281 = vrot.lane.b32.xlu0 %v242, 96
  %v282 = vpop.permute.xlu0 %281
  %283 = vrot.lane.b32.xlu0 %v246, 96
  %v284 = vpop.permute.xlu0 %283
  %285 = vrot.lane.b32.xlu0 %v250, 96
  %v286 = vpop.permute.xlu0 %285
  %287 = vrot.lane.b32.xlu0 %v254, 96
  %v288 = vpop.permute.xlu0 %287
  %289 = vrot.lane.b32.xlu0 %v258, 96
  %v290 = vpop.permute.xlu0 %289
  %291 = vrot.lane.b32.xlu0 %v262, 96
  %v292 = vpop.permute.xlu0 %291
  %293 = vrot.lane.b32.xlu0 %v261, 96
  %v294 = vpop.permute.xlu0 %293
  %vm311 = vcmask 1041408
  %v312 = vrot.slane %v23, 6
  %v313 = vrot.slane %v24, 6
  %v314 = vsel %vm311, %v312, %v313
  %v315 = vrot.slane %v25, 6
  %v316 = vsel %vm311, %v313, %v315
  %v317 = vrot.slane %v26, 6
  %v318 = vsel %vm311, %v315, %v317
  %v319 = vrot.slane %v27, 6
  %v320 = vsel %vm311, %v317, %v319
  %v321 = vrot.slane %v28, 6
  %v322 = vsel %vm311, %v319, %v321
  %v323 = vrot.slane %v29, 6
  %v324 = vsel %vm311, %v321, %v323
  %v325 = vrot.slane %v30, 6
  %v326 = vsel %vm311, %v323, %v325
  %v327 = vrot.slane %v31, 6
  %v328 = vsel %vm311, %v325, %v327
  %v329 = vrot.slane %v32, 6
  %v330 = vsel %vm311, %v327, %v329
  %v331 = vrot.slane %v33, 6
  %v332 = vsel %vm311, %v329, %v331
  %v333 = vrot.slane %v34, 6
  %v334 = vsel %vm311, %v331, %v333
  %v335 = vrot.slane %v35, 6
  %v336 = vsel %vm311, %v333, %v335
  %v337 = vrot.slane %v36, 6
  %v338 = vsel %vm311, %v335, %v337
  %v339 = vrot.slane %v37, 6
  %v340 = vsel %vm311, %v337, %v339
  %v341 = vrot.slane %v38, 6
  %v342 = vsel %vm311, %v339, %v341
  %343 = vrot.lane.b32.xlu0 %v314, 16
  %v344 = vpop.permute.xlu0 %343
  %345 = vrot.lane.b32.xlu0 %v316, 16
  %v346 = vpop.permute.xlu0 %345
  %347 = vrot.lane.b32.xlu0 %v318, 16
  %v348 = vpop.permute.xlu0 %347
  %349 = vrot.lane.b32.xlu0 %v320, 16
  %v350 = vpop.permute.xlu0 %349
  %351 = vrot.lane.b32.xlu0 %v322, 16
  %v352 = vpop.permute.xlu0 %351
  %353 = vrot.lane.b32.xlu0 %v324, 16
  %v354 = vpop.permute.xlu0 %353
  %355 = vrot.lane.b32.xlu0 %v326, 16
  %v356 = vpop.permute.xlu0 %355
  %357 = vrot.lane.b32.xlu0 %v328, 16
  %v358 = vpop.permute.xlu0 %357
  %359 = vrot.lane.b32.xlu0 %v330, 16
  %v360 = vpop.permute.xlu0 %359
  %361 = vrot.lane.b32.xlu0 %v332, 16
  %v362 = vpop.permute.xlu0 %361
  %363 = vrot.lane.b32.xlu0 %v334, 16
  %v364 = vpop.permute.xlu0 %363
  %365 = vrot.lane.b32.xlu0 %v336, 16
  %v366 = vpop.permute.xlu0 %365
  %367 = vrot.lane.b32.xlu0 %v338, 16
  %v368 = vpop.permute.xlu0 %367
  %369 = vrot.lane.b32.xlu0 %v340, 16
  %v370 = vpop.permute.xlu0 %369
  %371 = vrot.lane.b32.xlu0 %v342, 16
  %v372 = vpop.permute.xlu0 %371
  %373 = vrot.lane.b32.xlu0 %v341, 16
  %v374 = vpop.permute.xlu0 %373
  %vm375 = vcmask 392192
  %v377 = vsel %vm375, %v23, %v168
  %v379 = vsel %vm375, %v24, %v170
  %v381 = vsel %vm375, %v25, %v172
  %v383 = vsel %vm375, %v26, %v174
  %v385 = vsel %vm375, %v27, %v176
  %v387 = vsel %vm375, %v28, %v178
  %v389 = vsel %vm375, %v29, %v180
  %v391 = vsel %vm375, %v30, %v182
  %v393 = vsel %vm375, %v31, %v184
  %v395 = vsel %vm375, %v32, %v186
  %v397 = vsel %vm375, %v33, %v188
  %v399 = vsel %vm375, %v34, %v190
  %v401 = vsel %vm375, %v35, %v192
  %v403 = vsel %vm375, %v36, %v194
  %v405 = vsel %vm375, %v37, %v196
  %v407 = vsel %vm375, %v38, %v198
  %vm408 = vcmask 785408
  %v410 = vsel %vm408, %v377, %v264
  %v413 = vsel %vm408, %v379, %v266
  %v416 = vsel %vm408, %v381, %v268
  %v419 = vsel %vm408, %v383, %v270
  %v422 = vsel %vm408, %v385, %v272
  %v425 = vsel %vm408, %v387, %v274
  %v428 = vsel %vm408, %v389, %v276
  %v431 = vsel %vm408, %v391, %v278
  %v434 = vsel %vm408, %v393, %v280
  %v437 = vsel %vm408, %v395, %v282
  %v440 = vsel %vm408, %v397, %v284
  %v443 = vsel %vm408, %v399, %v286
  %v446 = vsel %vm408, %v401, %v288
  %v449 = vsel %vm408, %v403, %v290
  %v452 = vsel %vm408, %v405, %v292
  %v455 = vsel %vm408, %v407, %v294
  %vm457 = vcmask 130048
  %v459 = vsel %vm457, %v264, %v344
  %v461 = vsel %vm457, %v266, %v346
  %v463 = vsel %vm457, %v268, %v348
  %v465 = vsel %vm457, %v270, %v350
  %v467 = vsel %vm457, %v272, %v352
  %v469 = vsel %vm457, %v274, %v354
  %v471 = vsel %vm457, %v276, %v356
  %v473 = vsel %vm457, %v278, %v358
  %v475 = vsel %vm457, %v280, %v360
  %v477 = vsel %vm457, %v282, %v362
  %v479 = vsel %vm457, %v284, %v364
  %v481 = vsel %vm457, %v286, %v366
  %v483 = vsel %vm457, %v288, %v368
  %v485 = vsel %vm457, %v290, %v370
  %v487 = vsel %vm457, %v292, %v372
  %v489 = vsel %vm457, %v294, %v374
  %v490 = vld [vmem:[%s1] sm:$0xf]
  %v491 = vld [vmem:[%s1 + $0x4] sm:$0xf]
  %v492 = vld [vmem:[%s1 + $0x8] sm:$0xf]
  %v493 = vld [vmem:[%s1 + $0xc] sm:$0xf]
  %v494 = vld [vmem:[%s1 + $0x10] sm:$0xf]
  %v495 = vld [vmem:[%s1 + $0x14] sm:$0xf]
  %v496 = vld [vmem:[%s1 + $0x18] sm:$0xf]
  %v497 = vld [vmem:[%s1 + $0x1c] sm:$0xf]
  %v498 = vld [vmem:[%s1 + $0x20] sm:$0xf]
  %v499 = vld [vmem:[%s1 + $0x24] sm:$0xf]
  %v500 = vld [vmem:[%s1 + $0x28] sm:$0xf]
  %v501 = vld [vmem:[%s1 + $0x2c] sm:$0xf]
  %v502 = vld [vmem:[%s1 + $0x30] sm:$0xf]
  %v503 = vld [vmem:[%s1 + $0x34] sm:$0xf]
  %v504 = vld [vmem:[%s1 + $0x38] sm:$0xf]
  %v505 = vld [vmem:[%s1 + $0x3c] sm:$0xf]
  %v506 = vld [vmem:[%s1 + $0x40] sm:$0xf]
  %v507 = vld [vmem:[%s1 + $0x44] sm:$0xf]
  %v508 = vld [vmem:[%s1 + $0x48] sm:$0xf]
  %v509 = vld [vmem:[%s1 + $0x4c] sm:$0xf]
  %v510 = vld [vmem:[%s1 + $0x50] sm:$0xf]
  %v511 = vld [vmem:[%s1 + $0x54] sm:$0xf]
  %v512 = vld [vmem:[%s1 + $0x58] sm:$0xf]
  %v513 = vld [vmem:[%s1 + $0x5c] sm:$0xf]
  %v514 = vld [vmem:[%s2] sm:$0x1]
  %v516 = vlaneseq
  %v517 = vshrl.u32 %v516, 7
  %v518 = vsub.s32 0, %v517
  %v519 = vrot.slane %v514, %v518
  %v545 = vunpack.c.l.b16 %v490
  %v546 = vunpack.c.l.b16 %v491
  %v547 = vunpack.c.l.b16 %v492
  %v548 = vunpack.c.l.b16 %v493
  %v549 = vunpack.c.l.b16 %v494
  %v550 = vunpack.c.l.b16 %v495
  %v551 = vunpack.c.l.b16 %v496
  %v552 = vunpack.c.l.b16 %v497
  %v553 = vunpack.c.l.b16 %v498
  %v554 = vunpack.c.l.b16 %v499
  %v555 = vunpack.c.l.b16 %v500
  %v556 = vunpack.c.l.b16 %v501
  %v557 = vunpack.c.l.b16 %v502
  %v558 = vunpack.c.l.b16 %v503
  %v559 = vunpack.c.l.b16 %v504
  %v560 = vunpack.c.l.b16 %v505
  %v561 = vunpack.c.l.b16 %v506
  %v562 = vunpack.c.l.b16 %v507
  %v563 = vunpack.c.l.b16 %v508
  %v564 = vunpack.c.l.b16 %v509
  %v565 = vunpack.c.l.b16 %v510
  %v566 = vunpack.c.l.b16 %v511
  %v567 = vunpack.c.l.b16 %v512
  %v568 = vunpack.c.l.b16 %v513
  %v569 = vpack.c.b16 %v546, %v545
  %v570 = vpack.c.b16 %v548, %v547
  %v571 = vpack.c.b16 %v550, %v549
  %v572 = vpack.c.b16 %v552, %v551
  %v573 = vpack.c.b16 %v554, %v553
  %v574 = vpack.c.b16 %v556, %v555
  %v575 = vpack.c.b16 %v558, %v557
  %v576 = vpack.c.b16 %v560, %v559
  %v577 = vpack.c.b16 %v562, %v561
  %v578 = vpack.c.b16 %v564, %v563
  %v579 = vpack.c.b16 %v566, %v565
  %v580 = vpack.c.b16 %v568, %v567
  %vm593 = vcmask 523264
  %v594 = vsel %vm593, %v459, 0
  %v596 = vsel %vm593, %v461, 0
  %v598 = vsel %vm593, %v463, 0
  %v600 = vsel %vm593, %v465, 0
  %v602 = vsel %vm593, %v467, 0
  %v604 = vsel %vm593, %v469, 0
  %v606 = vsel %vm593, %v471, 0
  %v608 = vsel %vm593, %v473, 0
  %v610 = vsel %vm593, %v475, 0
  %v612 = vsel %vm593, %v477, 0
  %v614 = vsel %vm593, %v479, 0
  %v616 = vsel %vm593, %v481, 0
  %v618 = vsel %vm593, %v483, 0
  %v620 = vsel %vm593, %v485, 0
  %v622 = vsel %vm593, %v487, 0
  %v624 = vsel %vm593, %v489, 0
  %626 = vmatprep.subr.bf16.mxu0 0
  %627 = vmatpush1.bf16.msra.mxu0 %v569
  %628 = vmatprep.subr.bf16.mxu0 0
  %629 = vmatpush1.bf16.msra.mxu0 %v570
  %630 = vmatprep.subr.bf16.mxu0 0
  %631 = vmatpush1.bf16.msra.mxu0 %v571
  %632 = vmatprep.subr.bf16.mxu0 0
  %633 = vmatpush1.bf16.msra.mxu0 %v572
  %634 = vmatprep.subr.bf16.mxu0 0
  %635 = vmatpush1.bf16.msra.mxu0 %v573
  %636 = vmatprep.subr.bf16.mxu0 0
  %637 = vmatpush1.bf16.msra.mxu0 %v574
  %638 = vmatprep.subr.bf16.mxu0 0
  %639 = vmatpush1.bf16.msra.mxu0 %v575
  %640 = vmatprep.subr.bf16.mxu0 0
  %641 = vmatpush1.bf16.msra.mxu0 %v576
  %642 = vmatprep.subr.bf16.mxu0 0
  %643 = vmatpush1.bf16.msra.mxu0 %v577
  %644 = vmatprep.subr.bf16.mxu0 0
  %645 = vmatpush1.bf16.msra.mxu0 %v578
  %646 = vmatprep.subr.bf16.mxu0 0
  %647 = vmatpush1.bf16.msra.mxu0 %v579
  %648 = vmatprep.subr.bf16.mxu0 0
  %649 = vmatpush1.bf16.msra.mxu0 %v580
  %650 = vmatprep.subr.bf16.mxu0 0
  %651 = vmatpush1.bf16.msra.mxu0 0
  %652 = vmatprep.subr.bf16.mxu0 0
  %653 = vmatpush1.bf16.msra.mxu0 0
  %654 = vmatprep.subr.bf16.mxu0 0
  %655 = vmatpush1.bf16.msra.mxu0 0
  %656 = vmatprep.subr.bf16.mxu0 0
  %657 = vmatpush1.bf16.msra.mxu0 0
  %658 = vmatprep.mubr.bf16.mxu0 %v594
  %659 = vmatmul.mubr.bf16.gmra.mrb[0].mxu0 %v410
  %v660 = vpop.f32.mrb[0].mxu0
  %v661 = vadd.f32 %v519, %v660
  %v662 = vpop.f32.mrb[0].mxu0
  %v663 = vpop.f32.mrb[0].mxu0
  %v664 = vadd.f32 %v519, %v663
  %v665 = vpop.f32.mrb[0].mxu0
  %666 = vmatprep.mubr.bf16.mxu0 %v596
  %667 = vmatmul.mubr.bf16.gmra.mrb[0].mxu0 %v413
  %v668 = vpop.f32.mrb[0].mxu0
  %v669 = vadd.f32 %v519, %v668
  %v670 = vpop.f32.mrb[0].mxu0
  %v671 = vpop.f32.mrb[0].mxu0
  %v672 = vadd.f32 %v519, %v671
  %v673 = vpop.f32.mrb[0].mxu0
  %674 = vmatprep.mubr.bf16.mxu0 %v598
  %675 = vmatmul.mubr.bf16.gmra.mrb[0].mxu0 %v416
  %v676 = vpop.f32.mrb[0].mxu0
  %v677 = vadd.f32 %v519, %v676
  %v678 = vpop.f32.mrb[0].mxu0
  %v679 = vpop.f32.mrb[0].mxu0
  %v680 = vadd.f32 %v519, %v679
  %v681 = vpop.f32.mrb[0].mxu0
  %682 = vmatprep.mubr.bf16.mxu0 %v600
  %683 = vmatmul.mubr.bf16.gmra.mrb[0].mxu0 %v419
  %v684 = vpop.f32.mrb[0].mxu0
  %v685 = vadd.f32 %v519, %v684
  %v686 = vpop.f32.mrb[0].mxu0
  %v687 = vpop.f32.mrb[0].mxu0
  %v688 = vadd.f32 %v519, %v687
  %v689 = vpop.f32.mrb[0].mxu0
  %690 = vmatprep.mubr.bf16.mxu0 %v602
  %691 = vmatmul.mubr.bf16.gmra.mrb[0].mxu0 %v422
  %v692 = vpop.f32.mrb[0].mxu0
  %v693 = vadd.f32 %v519, %v692
  %v694 = vpop.f32.mrb[0].mxu0
  %v695 = vpop.f32.mrb[0].mxu0
  %v696 = vadd.f32 %v519, %v695
  %v697 = vpop.f32.mrb[0].mxu0
  %698 = vmatprep.mubr.bf16.mxu0 %v604
  %699 = vmatmul.mubr.bf16.gmra.mrb[0].mxu0 %v425
  %v700 = vpop.f32.mrb[0].mxu0
  %v701 = vadd.f32 %v519, %v700
  %v702 = vpop.f32.mrb[0].mxu0
  %v703 = vpop.f32.mrb[0].mxu0
  %v704 = vadd.f32 %v519, %v703
  %v705 = vpop.f32.mrb[0].mxu0
  %706 = vmatprep.mubr.bf16.mxu0 %v606
  %707 = vmatmul.mubr.bf16.gmra.mrb[0].mxu0 %v428
  %v708 = vpop.f32.mrb[0].mxu0
  %v709 = vadd.f32 %v519, %v708
  %v710 = vpop.f32.mrb[0].mxu0
  %v711 = vpop.f32.mrb[0].mxu0
  %v712 = vadd.f32 %v519, %v711
  %v713 = vpop.f32.mrb[0].mxu0
  %714 = vmatprep.mubr.bf16.mxu0 %v608
  %715 = vmatmul.mubr.bf16.gmra.mrb[0].mxu0 %v431
  %v716 = vpop.f32.mrb[0].mxu0
  %v717 = vadd.f32 %v519, %v716
  %v718 = vpop.f32.mrb[0].mxu0
  %v719 = vpop.f32.mrb[0].mxu0
  %v720 = vadd.f32 %v519, %v719
  %v721 = vpop.f32.mrb[0].mxu0
  %722 = vmatprep.mubr.bf16.mxu0 %v610
  %723 = vmatmul.mubr.bf16.gmra.mrb[0].mxu0 %v434
  %v724 = vpop.f32.mrb[0].mxu0
  %v725 = vadd.f32 %v519, %v724
  %v726 = vpop.f32.mrb[0].mxu0
  %v727 = vpop.f32.mrb[0].mxu0
  %v728 = vadd.f32 %v519, %v727
  %v729 = vpop.f32.mrb[0].mxu0
  %730 = vmatprep.mubr.bf16.mxu0 %v612
  %731 = vmatmul.mubr.bf16.gmra.mrb[0].mxu0 %v437
  %v732 = vpop.f32.mrb[0].mxu0
  %v733 = vadd.f32 %v519, %v732
  %v734 = vpop.f32.mrb[0].mxu0
  %v735 = vpop.f32.mrb[0].mxu0
  %v736 = vadd.f32 %v519, %v735
  %v737 = vpop.f32.mrb[0].mxu0
  %738 = vmatprep.mubr.bf16.mxu0 %v614
  %739 = vmatmul.mubr.bf16.gmra.mrb[0].mxu0 %v440
  %v740 = vpop.f32.mrb[0].mxu0
  %v741 = vadd.f32 %v519, %v740
  %v742 = vpop.f32.mrb[0].mxu0
  %v743 = vpop.f32.mrb[0].mxu0
  %v744 = vadd.f32 %v519, %v743
  %v745 = vpop.f32.mrb[0].mxu0
  %746 = vmatprep.mubr.bf16.mxu0 %v616
  %747 = vmatmul.mubr.bf16.gmra.mrb[0].mxu0 %v443
  %v748 = vpop.f32.mrb[0].mxu0
  %v749 = vadd.f32 %v519, %v748
  %v750 = vpop.f32.mrb[0].mxu0
  %v751 = vpop.f32.mrb[0].mxu0
  %v752 = vadd.f32 %v519, %v751
  %v753 = vpop.f32.mrb[0].mxu0
  %754 = vmatprep.mubr.bf16.mxu0 %v618
  %755 = vmatmul.mubr.bf16.gmra.mrb[0].mxu0 %v446
  %v756 = vpop.f32.mrb[0].mxu0
  %v757 = vadd.f32 %v519, %v756
  %v758 = vpop.f32.mrb[0].mxu0
  %v759 = vpop.f32.mrb[0].mxu0
  %v760 = vadd.f32 %v519, %v759
  %v761 = vpop.f32.mrb[0].mxu0
  %762 = vmatprep.mubr.bf16.mxu0 %v620
  %763 = vmatmul.mubr.bf16.gmra.mrb[0].mxu0 %v449
  %v764 = vpop.f32.mrb[0].mxu0
  %v765 = vadd.f32 %v519, %v764
  %v766 = vpop.f32.mrb[0].mxu0
  %v767 = vpop.f32.mrb[0].mxu0
  %v768 = vadd.f32 %v519, %v767
  %v769 = vpop.f32.mrb[0].mxu0
  %770 = vmatprep.mubr.bf16.mxu0 %v622
  %771 = vmatmul.mubr.bf16.gmra.mrb[0].mxu0 %v452
  %v772 = vpop.f32.mrb[0].mxu0
  %v773 = vadd.f32 %v519, %v772
  %v774 = vpop.f32.mrb[0].mxu0
  %v775 = vpop.f32.mrb[0].mxu0
  %v776 = vadd.f32 %v519, %v775
  %v777 = vpop.f32.mrb[0].mxu0
  %778 = vmatprep.mubr.bf16.mxu0 %v624
  %779 = vmatmul.mubr.bf16.gmra.mrb[0].mxu0 %v455
  %v780 = vpop.f32.mrb[0].mxu0
  %v781 = vadd.f32 %v519, %v780
  %v782 = vpop.f32.mrb[0].mxu0
  %v783 = vpop.f32.mrb[0].mxu0
  %v784 = vpop.f32.mrb[0].mxu0
  %785 = vdwg.mxu0
  %v786 = vmax.f32 %v661, 0.0
  %v787 = vmax.f32 %v664, 0.0
  %v788 = vmax.f32 %v669, 0.0
  %v789 = vmax.f32 %v672, 0.0
  %v790 = vmax.f32 %v677, 0.0
  %v791 = vmax.f32 %v680, 0.0
  %v792 = vmax.f32 %v685, 0.0
  %v793 = vmax.f32 %v688, 0.0
  %v794 = vmax.f32 %v693, 0.0
  %v795 = vmax.f32 %v696, 0.0
  %v796 = vmax.f32 %v701, 0.0
  %v797 = vmax.f32 %v704, 0.0
  %v798 = vmax.f32 %v709, 0.0
  %v799 = vmax.f32 %v712, 0.0
  %v800 = vmax.f32 %v717, 0.0
  %v801 = vmax.f32 %v720, 0.0
  %v802 = vmax.f32 %v725, 0.0
  %v803 = vmax.f32 %v728, 0.0
  %v804 = vmax.f32 %v733, 0.0
  %v805 = vmax.f32 %v736, 0.0
  %v806 = vmax.f32 %v741, 0.0
  %v807 = vmax.f32 %v744, 0.0
  %v808 = vmax.f32 %v749, 0.0
  %v809 = vmax.f32 %v752, 0.0
  %v810 = vmax.f32 %v757, 0.0
  %v811 = vmax.f32 %v760, 0.0
  %v812 = vmax.f32 %v765, 0.0
  %v813 = vmax.f32 %v768, 0.0
  %v814 = vmax.f32 %v773, 0.0
  %v815 = vmax.f32 %v776, 0.0
  %v816 = vmax.f32 %v781, 0.0
  %v817 = vpack.c.bf16 %v787, %v786
  %v818 = vpack.c.bf16 %v789, %v788
  %v819 = vpack.c.bf16 %v791, %v790
  %v820 = vpack.c.bf16 %v793, %v792
  %v821 = vpack.c.bf16 %v795, %v794
  %v822 = vpack.c.bf16 %v797, %v796
  %v823 = vpack.c.bf16 %v799, %v798
  %v824 = vpack.c.bf16 %v801, %v800
  %v825 = vpack.c.bf16 %v803, %v802
  %v826 = vpack.c.bf16 %v805, %v804
  %v827 = vpack.c.bf16 %v807, %v806
  %v828 = vpack.c.bf16 %v809, %v808
  %v829 = vpack.c.bf16 %v811, %v810
  %v830 = vpack.c.bf16 %v813, %v812
  %v831 = vpack.c.bf16 %v815, %v814
  %v832 = vpack.c.bf16 %v816, %v816
  %v849 = vunpack.c.l.b16 %v817
  %v850 = vunpack.c.h.b16 %v817
  %v851 = vunpack.c.l.b16 %v818
  %v852 = vunpack.c.h.b16 %v818
  %v853 = vunpack.c.l.b16 %v819
  %v854 = vunpack.c.h.b16 %v819
  %v855 = vunpack.c.l.b16 %v820
  %v856 = vunpack.c.h.b16 %v820
  %v857 = vunpack.c.l.b16 %v821
  %v858 = vunpack.c.h.b16 %v821
  %v859 = vunpack.c.l.b16 %v822
  %v860 = vunpack.c.h.b16 %v822
  %v861 = vunpack.c.l.b16 %v823
  %v862 = vunpack.c.h.b16 %v823
  %v863 = vunpack.c.l.b16 %v824
  %v864 = vunpack.c.h.b16 %v824
  %v865 = vunpack.c.l.b16 %v825
  %v866 = vunpack.c.h.b16 %v825
  %v867 = vunpack.c.l.b16 %v826
  %v868 = vunpack.c.h.b16 %v826
  %v869 = vunpack.c.l.b16 %v827
  %v870 = vunpack.c.h.b16 %v827
  %v871 = vunpack.c.l.b16 %v828
  %v872 = vunpack.c.h.b16 %v828
  %v873 = vunpack.c.l.b16 %v829
  %v874 = vunpack.c.h.b16 %v829
  %v875 = vunpack.c.l.b16 %v830
  %v876 = vunpack.c.h.b16 %v830
  %v877 = vunpack.c.l.b16 %v831
  %v878 = vunpack.c.h.b16 %v831
  %v879 = vunpack.c.l.b16 %v832
  %v880 = vpack.c.b16 %v849, %v849
  %v881 = vpack.c.b16 %v850, %v850
  %v882 = vpack.c.b16 %v851, %v851
  %v883 = vpack.c.b16 %v852, %v852
  %v884 = vpack.c.b16 %v853, %v853
  %v885 = vpack.c.b16 %v854, %v854
  %v886 = vpack.c.b16 %v855, %v855
  %v887 = vpack.c.b16 %v856, %v856
  %v888 = vpack.c.b16 %v857, %v857
  %v889 = vpack.c.b16 %v858, %v858
  %v890 = vpack.c.b16 %v859, %v859
  %v891 = vpack.c.b16 %v860, %v860
  %v892 = vpack.c.b16 %v861, %v861
  %v893 = vpack.c.b16 %v862, %v862
  %v894 = vpack.c.b16 %v863, %v863
  %v895 = vpack.c.b16 %v864, %v864
  %v896 = vpack.c.b16 %v865, %v865
  %v897 = vpack.c.b16 %v866, %v866
  %v898 = vpack.c.b16 %v867, %v867
  %v899 = vpack.c.b16 %v868, %v868
  %v900 = vpack.c.b16 %v869, %v869
  %v901 = vpack.c.b16 %v870, %v870
  %v902 = vpack.c.b16 %v871, %v871
  %v903 = vpack.c.b16 %v872, %v872
  %v904 = vpack.c.b16 %v873, %v873
  %v905 = vpack.c.b16 %v874, %v874
  %v906 = vpack.c.b16 %v875, %v875
  %v907 = vpack.c.b16 %v876, %v876
  %v908 = vpack.c.b16 %v877, %v877
  %v909 = vpack.c.b16 %v878, %v878
  %v910 = vpack.c.b16 %v879, %v879
  %vm942 = vcmask 257024
  %943 = vst.msk [vmem:[%s3] sm:$0xf] %vm942, %v880
  %944 = vst.msk [vmem:[%s3 + $0x4] sm:$0xf] %vm942, %v881
  %945 = vst.msk [vmem:[%s3 + $0x8] sm:$0xf] %vm942, %v882
  %946 = vst.msk [vmem:[%s3 + $0xc] sm:$0xf] %vm942, %v883
  %947 = vst.msk [vmem:[%s3 + $0x10] sm:$0xf] %vm942, %v884
  %948 = vst.msk [vmem:[%s3 + $0x14] sm:$0xf] %vm942, %v885
  %949 = vst.msk [vmem:[%s3 + $0x18] sm:$0xf] %vm942, %v886
  %950 = vst.msk [vmem:[%s3 + $0x1c] sm:$0xf] %vm942, %v887
  %951 = vst.msk [vmem:[%s3 + $0x20] sm:$0xf] %vm942, %v888
  %952 = vst.msk [vmem:[%s3 + $0x24] sm:$0xf] %vm942, %v889
  %953 = vst.msk [vmem:[%s3 + $0x28] sm:$0xf] %vm942, %v890
  %954 = vst.msk [vmem:[%s3 + $0x2c] sm:$0xf] %vm942, %v891
  %955 = vst.msk [vmem:[%s3 + $0x30] sm:$0xf] %vm942, %v892
  %956 = vst.msk [vmem:[%s3 + $0x34] sm:$0xf] %vm942, %v893
  %957 = vst.msk [vmem:[%s3 + $0x38] sm:$0xf] %vm942, %v894
  %958 = vst.msk [vmem:[%s3 + $0x3c] sm:$0xf] %vm942, %v895
  %959 = vst.msk [vmem:[%s3 + $0x40] sm:$0xf] %vm942, %v896
  %960 = vst.msk [vmem:[%s3 + $0x44] sm:$0xf] %vm942, %v897
  %961 = vst.msk [vmem:[%s3 + $0x48] sm:$0xf] %vm942, %v898
  %962 = vst.msk [vmem:[%s3 + $0x4c] sm:$0xf] %vm942, %v899
  %963 = vst.msk [vmem:[%s3 + $0x50] sm:$0xf] %vm942, %v900
  %964 = vst.msk [vmem:[%s3 + $0x54] sm:$0xf] %vm942, %v901
  %965 = vst.msk [vmem:[%s3 + $0x58] sm:$0xf] %vm942, %v902
  %966 = vst.msk [vmem:[%s3 + $0x5c] sm:$0xf] %vm942, %v903
  %967 = vst.msk [vmem:[%s3 + $0x60] sm:$0xf] %vm942, %v904
  %968 = vst.msk [vmem:[%s3 + $0x64] sm:$0xf] %vm942, %v905
  %969 = vst.msk [vmem:[%s3 + $0x68] sm:$0xf] %vm942, %v906
  %970 = vst.msk [vmem:[%s3 + $0x6c] sm:$0xf] %vm942, %v907
  %971 = vst.msk [vmem:[%s3 + $0x70] sm:$0xf] %vm942, %v908
  %972 = vst.msk [vmem:[%s3 + $0x74] sm:$0xf] %vm942, %v909
  %vm973 = vcmask 254976
  %974 = vst.msk [vmem:[%s3 + $0x78] sm:$0x3] %vm973, %v910
  %vm975 = vcmask 257026
  %976 = vst.msk [vmem:[%s3 + $0x78] sm:$0xc] %vm975, 0
  %977 = vst.msk [vmem:[%s3 + $0x7c] sm:$0xf] %vm942, 0
  // Predicated region
  $region14: #{nature_cnn_encoder_forward.3} parent=0 // pred_check
    _
  $region15: #{nature_cnn_encoder_forward.3} parent=0 // pred_check_branch
    %979 = sbr.rel (0) target = $region17
  $region16: #{nature_cnn_encoder_forward.3} parent=0 // pred_region
    _
  $region17: #{nature_cnn_encoder_forward.3} parent=0 // pred_fallthru
    _
  // Predicated region
  $region18: #{nature_cnn_encoder_forward.3} parent=0 // pred_check
    _
  $region19: #{nature_cnn_encoder_forward.3} parent=0 // pred_check_branch
    %981 = sbr.rel (0) target = $region21
  $region20: #{nature_cnn_encoder_forward.3} parent=0 // pred_region
    _
  $region21: #{nature_cnn_encoder_forward.3} parent=0 // pred_fallthru
    _

// kernel: nature_cnn_encoder_forward.4
$region0: #{nature_cnn_encoder_forward.4}
  #allocation0 [shape = 'u32[]', space=smem, size = 0x4, offset = 0x4, fixed_abs, tag = 'smem constant byte address 0x4 - core index']
  #allocation1 [shape = 'u32[144,128]{1,0:T(1,128)}', space=vmem, size = 0x12000, scoped, tag = 'internal scratch']
  %s0 = inlined_call_operand.vmem [shape: bf16[64,128], index: 0, kind: input, shape index: {}]
  %s1 = inlined_call_operand.vmem [shape: bf16[512,64], index: 1, kind: input, shape index: {}]
  %s2 = inlined_call_operand.vmem [shape: f32[1,64], index: 2, kind: input, shape index: {}]
  %s3 = inlined_call_operand.vmem [shape: bf16[576,64], index: 3, kind: input, shape index: {}]
  %s4 = inlined_call_operand.vmem [shape: f32[1,64], index: 4, kind: input, shape index: {}]
  %s5 = inlined_call_operand.vmem [shape: bf16[64,64], index: 5, kind: output, shape index: {}]
  %s6 = sld [smem:[#allocation0]]
  $region30: #{nature_cnn_encoder_forward.4} parent=0
    _
  %s8 = ssub.s32 1, %s6
  %s9 = scalar_select 0, %s8, %s6
  // Predicated region
  $region2: #{nature_cnn_encoder_forward.4} parent=0 // pred_check
    _
  $region3: #{nature_cnn_encoder_forward.4} parent=0 // pred_check_branch
    %11 = sbr.rel (0) target = $region5
  $region4: #{nature_cnn_encoder_forward.4} parent=0 // pred_region
    _
  $region5: #{nature_cnn_encoder_forward.4} parent=0 // pred_fallthru
    _
  // Predicated region
  $region6: #{nature_cnn_encoder_forward.4} parent=0 // pred_check
    _
  $region7: #{nature_cnn_encoder_forward.4} parent=0 // pred_check_branch
    %13 = sbr.rel (0) target = $region9
  $region8: #{nature_cnn_encoder_forward.4} parent=0 // pred_region
    _
  $region9: #{nature_cnn_encoder_forward.4} parent=0 // pred_fallthru
    _
  // Predicated region
  $region10: #{nature_cnn_encoder_forward.4} parent=0 // pred_check
    _
  $region11: #{nature_cnn_encoder_forward.4} parent=0 // pred_check_branch
    %15 = sbr.rel (0) target = $region13
  $region12: #{nature_cnn_encoder_forward.4} parent=0 // pred_region
    _
  $region13: #{nature_cnn_encoder_forward.4} parent=0 // pred_fallthru
    _
  // Predicated region
  $region14: #{nature_cnn_encoder_forward.4} parent=0 // pred_check
    _
  $region15: #{nature_cnn_encoder_forward.4} parent=0 // pred_check_branch
    %17 = sbr.rel (0) target = $region17
  $region16: #{nature_cnn_encoder_forward.4} parent=0 // pred_region
    _
  $region17: #{nature_cnn_encoder_forward.4} parent=0 // pred_fallthru
    _
  // Predicated region
  $region18: #{nature_cnn_encoder_forward.4} parent=0 // pred_check
    _
  $region19: #{nature_cnn_encoder_forward.4} parent=0 // pred_check_branch
    %19 = sbr.rel (0) target = $region21
  $region20: #{nature_cnn_encoder_forward.4} parent=0 // pred_region
    _
  $region21: #{nature_cnn_encoder_forward.4} parent=0 // pred_fallthru
    _
  %v21 = vld [vmem:[%s0] sm:$0xf]
  %v22 = vld [vmem:[%s0 + $0x4] sm:$0xf]
  %v23 = vld [vmem:[%s0 + $0x8] sm:$0xf]
  %v24 = vld [vmem:[%s0 + $0xc] sm:$0xf]
  %v25 = vld [vmem:[%s0 + $0x10] sm:$0xf]
  %v26 = vld [vmem:[%s0 + $0x14] sm:$0xf]
  %v27 = vld [vmem:[%s0 + $0x18] sm:$0xf]
  %v28 = vld [vmem:[%s0 + $0x1c] sm:$0xf]
  %v37 = vunpack.c.l.b16 %v21
  %v38 = vunpack.c.l.b16 %v22
  %v39 = vunpack.c.l.b16 %v23
  %v40 = vunpack.c.l.b16 %v24
  %v41 = vunpack.c.l.b16 %v25
  %v42 = vunpack.c.l.b16 %v26
  %v43 = vunpack.c.l.b16 %v27
  %v44 = vunpack.c.l.b16 %v28
  %v45 = vpack.c.b16 %v38, %v37
  %v46 = vpack.c.b16 %v40, %v39
  %v47 = vpack.c.b16 %v42, %v41
  %v48 = vpack.c.b16 %v44, %v43
  %vm53 = vsmask.f32 7424
  %v55 = vshrl.u32 %v45, 16
  %v57 = vshll.u32 %v45, 16
  %v59 = vrot.slane %v57, 1
  %v60 = vor.u32 %v55, %v59
  %v62 = vshll.u32 %v46, 16
  %v64 = vrot.slane %v62, 1
  %v65 = vsel %vm53, %v60, %v64
  %v66 = vshrl.u32 %v46, 16
  %v68 = vor.u32 %v66, %v64
  %v70 = vshll.u32 %v47, 16
  %v72 = vrot.slane %v70, 1
  %v73 = vsel %vm53, %v68, %v72
  %v74 = vshrl.u32 %v47, 16
  %v76 = vor.u32 %v74, %v72
  %v78 = vshll.u32 %v48, 16
  %v80 = vrot.slane %v78, 1
  %v81 = vsel %vm53, %v76, %v80
  %v82 = vshrl.u32 %v48, 16
  %v84 = vor.u32 %v82, %v80
  %vm89 = vsmask.f32 5376
  %v90 = vrot.slane %v55, 2
  %v91 = vrot.slane %v57, 3
  %v92 = vor.u32 %v90, %v91
  %v93 = vrot.slane %v66, 2
  %v94 = vrot.slane %v62, 3
  %v95 = vor.u32 %v93, %v94
  %v96 = vsel %vm89, %v92, %v95
  %v97 = vrot.slane %v74, 2
  %v98 = vrot.slane %v70, 3
  %v99 = vor.u32 %v97, %v98
  %v100 = vsel %vm89, %v95, %v99
  %v101 = vrot.slane %v82, 2
  %v102 = vrot.slane %v78, 3
  %v103 = vor.u32 %v101, %v102
  %v104 = vsel %vm89, %v99, %v103
  %vm109 = vcmask 1044480
  %v110 = vrot.slane %v45, 3
  %v111 = vrot.slane %v46, 3
  %v112 = vsel %vm109, %v110, %v111
  %v113 = vrot.slane %v47, 3
  %v114 = vsel %vm109, %v111, %v113
  %v115 = vrot.slane %v48, 3
  %v116 = vsel %vm109, %v113, %v115
  %v121 = vld [vmem:[%s1] sm:$0xf]
  %v122 = vld [vmem:[%s1 + $0x4] sm:$0xf]
  %v123 = vld [vmem:[%s1 + $0x8] sm:$0xf]
  %v124 = vld [vmem:[%s1 + $0xc] sm:$0xf]
  %v125 = vld [vmem:[%s1 + $0x10] sm:$0xf]
  %v126 = vld [vmem:[%s1 + $0x14] sm:$0xf]
  %v127 = vld [vmem:[%s1 + $0x18] sm:$0xf]
  %v128 = vld [vmem:[%s1 + $0x1c] sm:$0xf]
  %v129 = vld [vmem:[%s1 + $0x20] sm:$0xf]
  %v130 = vld [vmem:[%s1 + $0x24] sm:$0xf]
  %v131 = vld [vmem:[%s1 + $0x28] sm:$0xf]
  %v132 = vld [vmem:[%s1 + $0x2c] sm:$0xf]
  %v133 = vld [vmem:[%s1 + $0x30] sm:$0xf]
  %v134 = vld [vmem:[%s1 + $0x34] sm:$0xf]
  %v135 = vld [vmem:[%s1 + $0x38] sm:$0xf]
  %v136 = vld [vmem:[%s1 + $0x3c] sm:$0xf]
  %v137 = vld [vmem:[%s1 + $0x40] sm:$0xf]
  %v138 = vld [vmem:[%s1 + $0x44] sm:$0xf]
  %v139 = vld [vmem:[%s1 + $0x48] sm:$0xf]
  %v140 = vld [vmem:[%s1 + $0x4c] sm:$0xf]
  %v141 = vld [vmem:[%s1 + $0x50] sm:$0xf]
  %v142 = vld [vmem:[%s1 + $0x54] sm:$0xf]
  %v143 = vld [vmem:[%s1 + $0x58] sm:$0xf]
  %v144 = vld [vmem:[%s1 + $0x5c] sm:$0xf]
  %v145 = vld [vmem:[%s1 + $0x60] sm:$0xf]
  %v146 = vld [vmem:[%s1 + $0x64] sm:$0xf]
  %v147 = vld [vmem:[%s1 + $0x68] sm:$0xf]
  %v148 = vld [vmem:[%s1 + $0x6c] sm:$0xf]
  %v149 = vld [vmem:[%s1 + $0x70] sm:$0xf]
  %v150 = vld [vmem:[%s1 + $0x74] sm:$0xf]
  %v151 = vld [vmem:[%s1 + $0x78] sm:$0xf]
  %v152 = vld [vmem:[%s1 + $0x7c] sm:$0xf]
  %v153 = vld [vmem:[%s1 + $0x80] sm:$0xf]
  %v154 = vld [vmem:[%s1 + $0x84] sm:$0xf]
  %v155 = vld [vmem:[%s1 + $0x88] sm:$0xf]
  %v156 = vld [vmem:[%s1 + $0x8c] sm:$0xf]
  %v157 = vld [vmem:[%s1 + $0x90] sm:$0xf]
  %v158 = vld [vmem:[%s1 + $0x94] sm:$0xf]
  %v159 = vld [vmem:[%s1 + $0x98] sm:$0xf]
  %v160 = vld [vmem:[%s1 + $0x9c] sm:$0xf]
  %v161 = vld [vmem:[%s1 + $0xa0] sm:$0xf]
  %v162 = vld [vmem:[%s1 + $0xa4] sm:$0xf]
  %v163 = vld [vmem:[%s1 + $0xa8] sm:$0xf]
  %v164 = vld [vmem:[%s1 + $0xac] sm:$0xf]
  %v165 = vld [vmem:[%s1 + $0xb0] sm:$0xf]
  %v166 = vld [vmem:[%s1 + $0xb4] sm:$0xf]
  %v167 = vld [vmem:[%s1 + $0xb8] sm:$0xf]
  %v168 = vld [vmem:[%s1 + $0xbc] sm:$0xf]
  %v169 = vld [vmem:[%s1 + $0xc0] sm:$0xf]
  %v170 = vld [vmem:[%s1 + $0xc4] sm:$0xf]
  %v171 = vld [vmem:[%s1 + $0xc8] sm:$0xf]
  %v172 = vld [vmem:[%s1 + $0xcc] sm:$0xf]
  %v173 = vld [vmem:[%s1 + $0xd0] sm:$0xf]
  %v174 = vld [vmem:[%s1 + $0xd4] sm:$0xf]
  %v175 = vld [vmem:[%s1 + $0xd8] sm:$0xf]
  %v176 = vld [vmem:[%s1 + $0xdc] sm:$0xf]
  %v177 = vld [vmem:[%s1 + $0xe0] sm:$0xf]
  %v178 = vld [vmem:[%s1 + $0xe4] sm:$0xf]
  %v179 = vld [vmem:[%s1 + $0xe8] sm:$0xf]
  %v180 = vld [vmem:[%s1 + $0xec] sm:$0xf]
  %v181 = vld [vmem:[%s1 + $0xf0] sm:$0xf]
  %v182 = vld [vmem:[%s1 + $0xf4] sm:$0xf]
  %v183 = vld [vmem:[%s1 + $0xf8] sm:$0xf]
  %v184 = vld [vmem:[%s1 + $0xfc] sm:$0xf]
  %v185 = vld [vmem:[%s2] sm:$0x1]
  %v187 = vlaneseq
  %v188 = vshrl.u32 %v187, 7
  %v189 = vsub.s32 0, %v188
  %v190 = vrot.slane %v185, %v189
  %v256 = vunpack.c.l.b16 %v121
  %v257 = vunpack.c.l.b16 %v122
  %v258 = vunpack.c.l.b16 %v123
  %v259 = vunpack.c.l.b16 %v124
  %v260 = vunpack.c.l.b16 %v125
  %v261 = vunpack.c.l.b16 %v126
  %v262 = vunpack.c.l.b16 %v127
  %v263 = vunpack.c.l.b16 %v128
  %v264 = vunpack.c.l.b16 %v129
  %v265 = vunpack.c.l.b16 %v130
  %v266 = vunpack.c.l.b16 %v131
  %v267 = vunpack.c.l.b16 %v132
  %v268 = vunpack.c.l.b16 %v133
  %v269 = vunpack.c.l.b16 %v134
  %v270 = vunpack.c.l.b16 %v135
  %v271 = vunpack.c.l.b16 %v136
  %v272 = vunpack.c.l.b16 %v137
  %v273 = vunpack.c.l.b16 %v138
  %v274 = vunpack.c.l.b16 %v139
  %v275 = vunpack.c.l.b16 %v140
  %v276 = vunpack.c.l.b16 %v141
  %v277 = vunpack.c.l.b16 %v142
  %v278 = vunpack.c.l.b16 %v143
  %v279 = vunpack.c.l.b16 %v144
  %v280 = vunpack.c.l.b16 %v145
  %v281 = vunpack.c.l.b16 %v146
  %v282 = vunpack.c.l.b16 %v147
  %v283 = vunpack.c.l.b16 %v148
  %v284 = vunpack.c.l.b16 %v149
  %v285 = vunpack.c.l.b16 %v150
  %v286 = vunpack.c.l.b16 %v151
  %v287 = vunpack.c.l.b16 %v152
  %v288 = vunpack.c.l.b16 %v153
  %v289 = vunpack.c.l.b16 %v154
  %v290 = vunpack.c.l.b16 %v155
  %v291 = vunpack.c.l.b16 %v156
  %v292 = vunpack.c.l.b16 %v157
  %v293 = vunpack.c.l.b16 %v158
  %v294 = vunpack.c.l.b16 %v159
  %v295 = vunpack.c.l.b16 %v160
  %v296 = vunpack.c.l.b16 %v161
  %v297 = vunpack.c.l.b16 %v162
  %v298 = vunpack.c.l.b16 %v163
  %v299 = vunpack.c.l.b16 %v164
  %v300 = vunpack.c.l.b16 %v165
  %v301 = vunpack.c.l.b16 %v166
  %v302 = vunpack.c.l.b16 %v167
  %v303 = vunpack.c.l.b16 %v168
  %v304 = vunpack.c.l.b16 %v169
  %v305 = vunpack.c.l.b16 %v170
  %v306 = vunpack.c.l.b16 %v171
  %v307 = vunpack.c.l.b16 %v172
  %v308 = vunpack.c.l.b16 %v173
  %v309 = vunpack.c.l.b16 %v174
  %v310 = vunpack.c.l.b16 %v175
  %v311 = vunpack.c.l.b16 %v176
  %v312 = vunpack.c.l.b16 %v177
  %v313 = vunpack.c.l.b16 %v178
  %v314 = vunpack.c.l.b16 %v179
  %v315 = vunpack.c.l.b16 %v180
  %v316 = vunpack.c.l.b16 %v181
  %v317 = vunpack.c.l.b16 %v182
  %v318 = vunpack.c.l.b16 %v183
  %v319 = vunpack.c.l.b16 %v184
  %v320 = vpack.c.b16 %v257, %v256
  %v321 = vpack.c.b16 %v259, %v258
  %v322 = vpack.c.b16 %v261, %v260
  %v323 = vpack.c.b16 %v263, %v262
  %v324 = vpack.c.b16 %v265, %v264
  %v325 = vpack.c.b16 %v267, %v266
  %v326 = vpack.c.b16 %v269, %v268
  %v327 = vpack.c.b16 %v271, %v270
  %v328 = vpack.c.b16 %v273, %v272
  %v329 = vpack.c.b16 %v275, %v274
  %v330 = vpack.c.b16 %v277, %v276
  %v331 = vpack.c.b16 %v279, %v278
  %v332 = vpack.c.b16 %v281, %v280
  %v333 = vpack.c.b16 %v283, %v282
  %v334 = vpack.c.b16 %v285, %v284
  %v335 = vpack.c.b16 %v287, %v286
  %v336 = vpack.c.b16 %v289, %v288
  %v337 = vpack.c.b16 %v291, %v290
  %v338 = vpack.c.b16 %v293, %v292
  %v339 = vpack.c.b16 %v295, %v294
  %v340 = vpack.c.b16 %v297, %v296
  %v341 = vpack.c.b16 %v299, %v298
  %v342 = vpack.c.b16 %v301, %v300
  %v343 = vpack.c.b16 %v303, %v302
  %v344 = vpack.c.b16 %v305, %v304
  %v345 = vpack.c.b16 %v307, %v306
  %v346 = vpack.c.b16 %v309, %v308
  %v347 = vpack.c.b16 %v311, %v310
  %v348 = vpack.c.b16 %v313, %v312
  %v349 = vpack.c.b16 %v315, %v314
  %v350 = vpack.c.b16 %v317, %v316
  %v351 = vpack.c.b16 %v319, %v318
  %384 = vmatprep.subr.bf16.mxu0 0
  %385 = vmatpush1.bf16.msra.mxu0 %v320
  %386 = vmatprep.subr.bf16.mxu0 0
  %387 = vmatpush1.bf16.msra.mxu0 %v321
  %388 = vmatprep.subr.bf16.mxu0 0
  %389 = vmatpush1.bf16.msra.mxu0 %v322
  %390 = vmatprep.subr.bf16.mxu0 0
  %391 = vmatpush1.bf16.msra.mxu0 %v323
  %392 = vmatprep.subr.bf16.mxu0 0
  %393 = vmatpush1.bf16.msra.mxu0 %v324
  %394 = vmatprep.subr.bf16.mxu0 0
  %395 = vmatpush1.bf16.msra.mxu0 %v325
  %396 = vmatprep.subr.bf16.mxu0 0
  %397 = vmatpush1.bf16.msra.mxu0 %v326
  %398 = vmatprep.subr.bf16.mxu0 0
  %399 = vmatpush1.bf16.msra.mxu0 %v327
  %400 = vmatprep.subr.bf16.mxu0 0
  %401 = vmatpush1.bf16.msra.mxu0 %v328
  %402 = vmatprep.subr.bf16.mxu0 0
  %403 = vmatpush1.bf16.msra.mxu0 %v329
  %404 = vmatprep.subr.bf16.mxu0 0
  %405 = vmatpush1.bf16.msra.mxu0 %v330
  %406 = vmatprep.subr.bf16.mxu0 0
  %407 = vmatpush1.bf16.msra.mxu0 %v331
  %408 = vmatprep.subr.bf16.mxu0 0
  %409 = vmatpush1.bf16.msra.mxu0 %v332
  %410 = vmatprep.subr.bf16.mxu0 0
  %411 = vmatpush1.bf16.msra.mxu0 %v333
  %412 = vmatprep.subr.bf16.mxu0 0
  %413 = vmatpush1.bf16.msra.mxu0 %v334
  %414 = vmatprep.subr.bf16.mxu0 0
  %415 = vmatpush1.bf16.msra.mxu0 %v335
  %416 = vmatprep.mubr.bf16.mxu0 %v65
  %417 = vmatmul.mubr.bf16.gmra.mrb[0].mxu0 %v45
  %v418 = vpop.f32.mrb[0].mxu0
  %v419 = vadd.f32 %v190, %v418
  %v420 = vpop.f32.mrb[0].mxu0
  %v421 = vpop.f32.mrb[0].mxu0
  %v422 = vadd.f32 %v190, %v421
  %v423 = vpop.f32.mrb[0].mxu0
  %424 = vmatprep.mubr.bf16.mxu0 %v73
  %425 = vmatmul.mubr.bf16.gmra.mrb[0].mxu0 %v46
  %v426 = vpop.f32.mrb[0].mxu0
  %v427 = vadd.f32 %v190, %v426
  %v428 = vpop.f32.mrb[0].mxu0
  %v429 = vpop.f32.mrb[0].mxu0
  %v430 = vadd.f32 %v190, %v429
  %v431 = vpop.f32.mrb[0].mxu0
  %432 = vmatprep.mubr.bf16.mxu0 %v81
  %433 = vmatmul.mubr.bf16.gmra.mrb[0].mxu0 %v47
  %v434 = vpop.f32.mrb[0].mxu0
  %v435 = vadd.f32 %v190, %v434
  %v436 = vpop.f32.mrb[0].mxu0
  %v437 = vpop.f32.mrb[0].mxu0
  %v438 = vadd.f32 %v190, %v437
  %v439 = vpop.f32.mrb[0].mxu0
  %440 = vmatprep.mubr.bf16.mxu0 %v84
  %441 = vmatmul.mubr.bf16.gmra.mrb[0].mxu0 %v48
  %v442 = vpop.f32.mrb[0].mxu0
  %v443 = vadd.f32 %v190, %v442
  %v444 = vpop.f32.mrb[0].mxu0
  %v445 = vpop.f32.mrb[0].mxu0
  %v446 = vadd.f32 %v190, %v445
  %v447 = vpop.f32.mrb[0].mxu0
  %448 = vdwg.mxu0
  %449 = vmatprep.subr.bf16.mxu0 0
  %450 = vmatpush1.bf16.msra.mxu0 %v336
  %451 = vmatprep.subr.bf16.mxu0 0
  %452 = vmatpush1.bf16.msra.mxu0 %v337
  %453 = vmatprep.subr.bf16.mxu0 0
  %454 = vmatpush1.bf16.msra.mxu0 %v338
  %455 = vmatprep.subr.bf16.mxu0 0
  %456 = vmatpush1.bf16.msra.mxu0 %v339
  %457 = vmatprep.subr.bf16.mxu0 0
  %458 = vmatpush1.bf16.msra.mxu0 %v340
  %459 = vmatprep.subr.bf16.mxu0 0
  %460 = vmatpush1.bf16.msra.mxu0 %v341
  %461 = vmatprep.subr.bf16.mxu0 0
  %462 = vmatpush1.bf16.msra.mxu0 %v342
  %463 = vmatprep.subr.bf16.mxu0 0
  %464 = vmatpush1.bf16.msra.mxu0 %v343
  %465 = vmatprep.subr.bf16.mxu0 0
  %466 = vmatpush1.bf16.msra.mxu0 %v344
  %467 = vmatprep.subr.bf16.mxu0 0
  %468 = vmatpush1.bf16.msra.mxu0 %v345
  %469 = vmatprep.subr.bf16.mxu0 0
  %470 = vmatpush1.bf16.msra.mxu0 %v346
  %471 = vmatprep.subr.bf16.mxu0 0
  %472 = vmatpush1.bf16.msra.mxu0 %v347
  %473 = vmatprep.subr.bf16.mxu0 0
  %474 = vmatpush1.bf16.msra.mxu0 %v348
  %475 = vmatprep.subr.bf16.mxu0 0
  %476 = vmatpush1.bf16.msra.mxu0 %v349
  %477 = vmatprep.subr.bf16.mxu0 0
  %478 = vmatpush1.bf16.msra.mxu0 %v350
  %479 = vmatprep.subr.bf16.mxu0 0
  %480 = vmatpush1.bf16.msra.mxu0 %v351
  %481 = vmatprep.mubr.bf16.mxu0 %v112
  %482 = vmatmul.mubr.bf16.gmra.mrb[0].mxu0 %v96
  %v483 = vpop.f32.mrb[0].mxu0
  %v484 = vadd.f32 %v419, %v483
  %v485 = vpop.f32.mrb[0].mxu0
  %v486 = vpop.f32.mrb[0].mxu0
  %v487 = vadd.f32 %v422, %v486
  %v488 = vpop.f32.mrb[0].mxu0
  %489 = vmatprep.mubr.bf16.mxu0 %v114
  %490 = vmatmul.mubr.bf16.gmra.mrb[0].mxu0 %v100
  %v491 = vpop.f32.mrb[0].mxu0
  %v492 = vadd.f32 %v427, %v491
  %v493 = vpop.f32.mrb[0].mxu0
  %v494 = vpop.f32.mrb[0].mxu0
  %v495 = vadd.f32 %v430, %v494
  %v496 = vpop.f32.mrb[0].mxu0
  %497 = vmatprep.mubr.bf16.mxu0 %v116
  %498 = vmatmul.mubr.bf16.gmra.mrb[0].mxu0 %v104
  %v499 = vpop.f32.mrb[0].mxu0
  %v500 = vadd.f32 %v435, %v499
  %v501 = vpop.f32.mrb[0].mxu0
  %v502 = vpop.f32.mrb[0].mxu0
  %v503 = vadd.f32 %v438, %v502
  %v504 = vpop.f32.mrb[0].mxu0
  %505 = vmatprep.mubr.bf16.mxu0 %v115
  %506 = vmatmul.mubr.bf16.gmra.mrb[0].mxu0 %v103
  %v507 = vpop.f32.mrb[0].mxu0
  %v508 = vadd.f32 %v443, %v507
  %v509 = vpop.f32.mrb[0].mxu0
  %v510 = vpop.f32.mrb[0].mxu0
  %v511 = vadd.f32 %v446, %v510
  %v512 = vpop.f32.mrb[0].mxu0
  %513 = vdwg.mxu0
  %v514 = vmax.f32 %v484, 0.0
  %v515 = vmax.f32 %v487, 0.0
  %v516 = vmax.f32 %v492, 0.0
  %v517 = vmax.f32 %v495, 0.0
  %v518 = vmax.f32 %v500, 0.0
  %v519 = vmax.f32 %v503, 0.0
  %v520 = vmax.f32 %v508, 0.0
  %v521 = vmax.f32 %v511, 0.0
  %v522 = vpack.c.bf16 %v515, %v514
  %v523 = vpack.c.bf16 %v517, %v516
  %v524 = vpack.c.bf16 %v519, %v518
  %v525 = vpack.c.bf16 %v521, %v520
  %v527 = vshrl.u32 %v522, 16
  %v529 = vshll.u32 %v522, 16
  %v531 = vrot.slane %v529, 1
  %v532 = vor.u32 %v527, %v531
  %v534 = vshll.u32 %v523, 16
  %v536 = vrot.slane %v534, 1
  %v537 = vsel %vm53, %v532, %v536
  %v538 = vshrl.u32 %v523, 16
  %v540 = vor.u32 %v538, %v536
  %v542 = vshll.u32 %v524, 16
  %v544 = vrot.slane %v542, 1
  %v545 = vsel %vm53, %v540, %v544
  %v546 = vshrl.u32 %v524, 16
  %v548 = vor.u32 %v546, %v544
  %549 = vrot.lane.b32.xlu0 %v537, 64
  %v550 = vpop.permute.xlu0 %549
  %551 = vrot.lane.b32.xlu0 %v545, 64
  %v552 = vpop.permute.xlu0 %551
  %553 = vrot.lane.b32.xlu0 %v548, 64
  %v554 = vpop.permute.xlu0 %553
  %vm558 = vcmask 1046528
  %v559 = vrot.slane %v522, 1
  %v560 = vrot.slane %v523, 1
  %v561 = vsel %vm558, %v559, %v560
  %v562 = vrot.slane %v524, 1
  %v563 = vsel %vm558, %v560, %v562
  %v564 = vrot.slane %v527, 2
  %v565 = vrot.slane %v529, 3
  %v566 = vor.u32 %v564, %v565
  %v567 = vrot.slane %v538, 2
  %v568 = vrot.slane %v534, 3
  %v569 = vor.u32 %v567, %v568
  %v570 = vsel %vm89, %v566, %v569
  %v571 = vrot.slane %v546, 2
  %v572 = vrot.slane %v542, 3
  %v573 = vor.u32 %v571, %v572
  %v574 = vsel %vm89, %v569, %v573
  %v576 = vshrl.u32 %v525, 16
  %v578 = vrot.slane %v576, 2
  %v579 = vshll.u32 %v525, 16
  %v581 = vrot.slane %v579, 3
  %v582 = vor.u32 %v578, %v581
  %v583 = vsel %vm89, %v573, %v582
  %584 = vrot.lane.b32.xlu0 %v570, 64
  %v585 = vpop.permute.xlu0 %584
  %586 = vrot.lane.b32.xlu0 %v574, 64
  %v587 = vpop.permute.xlu0 %586
  %588 = vrot.lane.b32.xlu0 %v583, 64
  %v589 = vpop.permute.xlu0 %588
  %v591 = vrot.slane %v522, 3
  %v592 = vrot.slane %v523, 3
  %v593 = vsel %vm109, %v591, %v592
  %v594 = vrot.slane %v524, 3
  %v595 = vsel %vm109, %v592, %v594
  %v596 = vrot.slane %v525, 3
  %v597 = vsel %vm109, %v594, %v596
  %vm598 = vsmask.f32 4352
  %v599 = vrot.slane %v527, 3
  %v600 = vrot.slane %v529, 4
  %v601 = vor.u32 %v599, %v600
  %v602 = vrot.slane %v538, 3
  %v603 = vrot.slane %v534, 4
  %v604 = vor.u32 %v602, %v603
  %v605 = vsel %vm598, %v601, %v604
  %v606 = vrot.slane %v546, 3
  %v607 = vrot.slane %v542, 4
  %v608 = vor.u32 %v606, %v607
  %v609 = vsel %vm598, %v604, %v608
  %v610 = vrot.slane %v576, 3
  %v611 = vrot.slane %v579, 4
  %v612 = vor.u32 %v610, %v611
  %v613 = vsel %vm598, %v608, %v612
  %614 = vrot.lane.b32.xlu0 %v605, 64
  %v615 = vpop.permute.xlu0 %614
  %616 = vrot.lane.b32.xlu0 %v609, 64
  %v617 = vpop.permute.xlu0 %616
  %618 = vrot.lane.b32.xlu0 %v613, 64
  %v619 = vpop.permute.xlu0 %618
  %vm620 = vcmask 1042432
  %v621 = vrot.slane %v522, 5
  %v622 = vrot.slane %v523, 5
  %v623 = vsel %vm620, %v621, %v622
  %v624 = vrot.slane %v524, 5
  %v625 = vsel %vm620, %v622, %v624
  %v626 = vrot.slane %v525, 5
  %v627 = vsel %vm620, %v624, %v626
  %vm628 = vsmask.f32 2304
  %v629 = vrot.slane %v527, 5
  %v630 = vrot.slane %v529, 6
  %v631 = vor.u32 %v629, %v630
  %v632 = vrot.slane %v538, 5
  %v633 = vrot.slane %v534, 6
  %v634 = vor.u32 %v632, %v633
  %v635 = vsel %vm628, %v631, %v634
  %v636 = vrot.slane %v546, 5
  %v637 = vrot.slane %v542, 6
  %v638 = vor.u32 %v636, %v637
  %v639 = vsel %vm628, %v634, %v638
  %v640 = vrot.slane %v576, 5
  %v641 = vrot.slane %v579, 6
  %v642 = vor.u32 %v640, %v641
  %v643 = vsel %vm628, %v638, %v642
  %644 = vrot.lane.b32.xlu0 %v635, 64
  %v645 = vpop.permute.xlu0 %644
  %646 = vrot.lane.b32.xlu0 %v639, 64
  %v647 = vpop.permute.xlu0 %646
  %648 = vrot.lane.b32.xlu0 %v643, 64
  %v649 = vpop.permute.xlu0 %648
  %vm650 = vcmask 1041408
  %v651 = vrot.slane %v522, 6
  %v652 = vrot.slane %v523, 6
  %v653 = vsel %vm650, %v651, %v652
  %v654 = vrot.slane %v524, 6
  %v655 = vsel %vm650, %v652, %v654
  %v656 = vrot.slane %v525, 6
  %v657 = vsel %vm650, %v654, %v656
  %vm658 = vcmask 523264
  %v660 = vsel %vm658, %v522, %v550
  %v663 = vsel %vm658, %v523, %v552
  %v666 = vsel %vm658, %v524, %v554
  %v670 = vsel %vm658, %v561, %v585
  %v674 = vsel %vm658, %v563, %v587
  %v678 = vsel %vm658, %v562, %v589
  %v682 = vsel %vm658, %v593, %v615
  %v686 = vsel %vm658, %v595, %v617
  %v690 = vsel %vm658, %v597, %v619
  %v694 = vsel %vm658, %v623, %v645
  %v698 = vsel %vm658, %v625, %v647
  %v702 = vsel %vm658, %v627, %v649
  %v704 = vld [vmem:[%s3] sm:$0xf]
  %v705 = vld [vmem:[%s3 + $0x4] sm:$0xf]
  %v706 = vld [vmem:[%s3 + $0x8] sm:$0xf]
  %v707 = vld [vmem:[%s3 + $0xc] sm:$0xf]
  %v708 = vld [vmem:[%s3 + $0x10] sm:$0xf]
  %v709 = vld [vmem:[%s3 + $0x14] sm:$0xf]
  %v710 = vld [vmem:[%s3 + $0x18] sm:$0xf]
  %v711 = vld [vmem:[%s3 + $0x1c] sm:$0xf]
  %v712 = vld [vmem:[%s3 + $0x20] sm:$0xf]
  %v713 = vld [vmem:[%s3 + $0x24] sm:$0xf]
  %v714 = vld [vmem:[%s3 + $0x28] sm:$0xf]
  %v715 = vld [vmem:[%s3 + $0x2c] sm:$0xf]
  %v716 = vld [vmem:[%s3 + $0x30] sm:$0xf]
  %v717 = vld [vmem:[%s3 + $0x34] sm:$0xf]
  %v718 = vld [vmem:[%s3 + $0x38] sm:$0xf]
  %v719 = vld [vmem:[%s3 + $0x3c] sm:$0xf]
  %v720 = vld [vmem:[%s3 + $0x40] sm:$0xf]
  %v721 = vld [vmem:[%s3 + $0x44] sm:$0xf]
  %v722 = vld [vmem:[%s3 + $0x48] sm:$0xf]
  %v723 = vld [vmem:[%s3 + $0x4c] sm:$0xf]
  %v724 = vld [vmem:[%s3 + $0x50] sm:$0xf]
  %v725 = vld [vmem:[%s3 + $0x54] sm:$0xf]
  %v726 = vld [vmem:[%s3 + $0x58] sm:$0xf]
  %v727 = vld [vmem:[%s3 + $0x5c] sm:$0xf]
  %v728 = vld [vmem:[%s3 + $0x60] sm:$0xf]
  %v729 = vld [vmem:[%s3 + $0x64] sm:$0xf]
  %v730 = vld [vmem:[%s3 + $0x68] sm:$0xf]
  %v731 = vld [vmem:[%s3 + $0x6c] sm:$0xf]
  %v732 = vld [vmem:[%s3 + $0x70] sm:$0xf]
  %v733 = vld [vmem:[%s3 + $0x74] sm:$0xf]
  %v734 = vld [vmem:[%s3 + $0x78] sm:$0xf]
  %v735 = vld [vmem:[%s3 + $0x7c] sm:$0xf]
  %v736 = vld [vmem:[%s3 + $0x80] sm:$0xf]
  %v737 = vld [vmem:[%s3 + $0x84] sm:$0xf]
  %v738 = vld [vmem:[%s3 + $0x88] sm:$0xf]
  %v739 = vld [vmem:[%s3 + $0x8c] sm:$0xf]
  %v740 = vld [vmem:[%s3 + $0x90] sm:$0xf]
  %v741 = vld [vmem:[%s3 + $0x94] sm:$0xf]
  %v742 = vld [vmem:[%s3 + $0x98] sm:$0xf]
  %v743 = vld [vmem:[%s3 + $0x9c] sm:$0xf]
  %v744 = vld [vmem:[%s3 + $0xa0] sm:$0xf]
  %v745 = vld [vmem:[%s3 + $0xa4] sm:$0xf]
  %v746 = vld [vmem:[%s3 + $0xa8] sm:$0xf]
  %v747 = vld [vmem:[%s3 + $0xac] sm:$0xf]
  %v748 = vld [vmem:[%s3 + $0xb0] sm:$0xf]
  %v749 = vld [vmem:[%s3 + $0xb4] sm:$0xf]
  %v750 = vld [vmem:[%s3 + $0xb8] sm:$0xf]
  %v751 = vld [vmem:[%s3 + $0xbc] sm:$0xf]
  %v752 = vld [vmem:[%s3 + $0xc0] sm:$0xf]
  %v753 = vld [vmem:[%s3 + $0xc4] sm:$0xf]
  %v754 = vld [vmem:[%s3 + $0xc8] sm:$0xf]
  %v755 = vld [vmem:[%s3 + $0xcc] sm:$0xf]
  %v756 = vld [vmem:[%s3 + $0xd0] sm:$0xf]
  %v757 = vld [vmem:[%s3 + $0xd4] sm:$0xf]
  %v758 = vld [vmem:[%s3 + $0xd8] sm:$0xf]
  %v759 = vld [vmem:[%s3 + $0xdc] sm:$0xf]
  %v760 = vld [vmem:[%s3 + $0xe0] sm:$0xf]
  %v761 = vld [vmem:[%s3 + $0xe4] sm:$0xf]
  %v762 = vld [vmem:[%s3 + $0xe8] sm:$0xf]
  %v763 = vld [vmem:[%s3 + $0xec] sm:$0xf]
  %v764 = vld [vmem:[%s3 + $0xf0] sm:$0xf]
  %v765 = vld [vmem:[%s3 + $0xf4] sm:$0xf]
  %v766 = vld [vmem:[%s3 + $0xf8] sm:$0xf]
  %v767 = vld [vmem:[%s3 + $0xfc] sm:$0xf]
  %v768 = vld [vmem:[%s3 + $0x100] sm:$0xf]
  %v769 = vld [vmem:[%s3 + $0x104] sm:$0xf]
  %v770 = vld [vmem:[%s3 + $0x108] sm:$0xf]
  %v771 = vld [vmem:[%s3 + $0x10c] sm:$0xf]
  %v772 = vld [vmem:[%s3 + $0x110] sm:$0xf]
  %v773 = vld [vmem:[%s3 + $0x114] sm:$0xf]
  %v774 = vld [vmem:[%s3 + $0x118] sm:$0xf]
  %v775 = vld [vmem:[%s3 + $0x11c] sm:$0xf]
  %v776 = vld [vmem:[%s4] sm:$0x1]
  %v778 = vlaneseq
  %v779 = vshrl.u32 %v778, 7
  %v780 = vsub.s32 0, %v779
  %v781 = vrot.slane %v776, %v780
  %v855 = vunpack.c.l.b16 %v704
  %v856 = vunpack.c.l.b16 %v705
  %v857 = vunpack.c.l.b16 %v706
  %v858 = vunpack.c.l.b16 %v707
  %v859 = vunpack.c.l.b16 %v708
  %v860 = vunpack.c.l.b16 %v709
  %v861 = vunpack.c.l.b16 %v710
  %v862 = vunpack.c.l.b16 %v711
  %v863 = vunpack.c.l.b16 %v712
  %v864 = vunpack.c.l.b16 %v713
  %v865 = vunpack.c.l.b16 %v714
  %v866 = vunpack.c.l.b16 %v715
  %v867 = vunpack.c.l.b16 %v716
  %v868 = vunpack.c.l.b16 %v717
  %v869 = vunpack.c.l.b16 %v718
  %v870 = vunpack.c.l.b16 %v719
  %v871 = vunpack.c.l.b16 %v720
  %v872 = vunpack.c.l.b16 %v721
  %v873 = vunpack.c.l.b16 %v722
  %v874 = vunpack.c.l.b16 %v723
  %v875 = vunpack.c.l.b16 %v724
  %v876 = vunpack.c.l.b16 %v725
  %v877 = vunpack.c.l.b16 %v726
  %v878 = vunpack.c.l.b16 %v727
  %v879 = vunpack.c.l.b16 %v728
  %v880 = vunpack.c.l.b16 %v729
  %v881 = vunpack.c.l.b16 %v730
  %v882 = vunpack.c.l.b16 %v731
  %v883 = vunpack.c.l.b16 %v732
  %v884 = vunpack.c.l.b16 %v733
  %v885 = vunpack.c.l.b16 %v734
  %v886 = vunpack.c.l.b16 %v735
  %v887 = vunpack.c.l.b16 %v736
  %v888 = vunpack.c.l.b16 %v737
  %v889 = vunpack.c.l.b16 %v738
  %v890 = vunpack.c.l.b16 %v739
  %v891 = vunpack.c.l.b16 %v740
  %v892 = vunpack.c.l.b16 %v741
  %v893 = vunpack.c.l.b16 %v742
  %v894 = vunpack.c.l.b16 %v743
  %v895 = vunpack.c.l.b16 %v744
  %v896 = vunpack.c.l.b16 %v745
  %v897 = vunpack.c.l.b16 %v746
  %v898 = vunpack.c.l.b16 %v747
  %v899 = vunpack.c.l.b16 %v748
  %v900 = vunpack.c.l.b16 %v749
  %v901 = vunpack.c.l.b16 %v750
  %v902 = vunpack.c.l.b16 %v751
  %v903 = vunpack.c.l.b16 %v752
  %v904 = vunpack.c.l.b16 %v753
  %v905 = vunpack.c.l.b16 %v754
  %v906 = vunpack.c.l.b16 %v755
  %v907 = vunpack.c.l.b16 %v756
  %v908 = vunpack.c.l.b16 %v757
  %v909 = vunpack.c.l.b16 %v758
  %v910 = vunpack.c.l.b16 %v759
  %v911 = vunpack.c.l.b16 %v760
  %v912 = vunpack.c.l.b16 %v761
  %v913 = vunpack.c.l.b16 %v762
  %v914 = vunpack.c.l.b16 %v763
  %v915 = vunpack.c.l.b16 %v764
  %v916 = vunpack.c.l.b16 %v765
  %v917 = vunpack.c.l.b16 %v766
  %v918 = vunpack.c.l.b16 %v767
  %v919 = vunpack.c.l.b16 %v768
  %v920 = vunpack.c.l.b16 %v769
  %v921 = vunpack.c.l.b16 %v770
  %v922 = vunpack.c.l.b16 %v771
  %v923 = vunpack.c.l.b16 %v772
  %v924 = vunpack.c.l.b16 %v773
  %v925 = vunpack.c.l.b16 %v774
  %v926 = vunpack.c.l.b16 %v775
  %v927 = vpack.c.b16 %v856, %v855
  %v928 = vpack.c.b16 %v858, %v857
  %v929 = vpack.c.b16 %v860, %v859
  %v930 = vpack.c.b16 %v862, %v861
  %v931 = vpack.c.b16 %v864, %v863
  %v932 = vpack.c.b16 %v866, %v865
  %v933 = vpack.c.b16 %v868, %v867
  %v934 = vpack.c.b16 %v870, %v869
  %v935 = vpack.c.b16 %v872, %v871
  %v936 = vpack.c.b16 %v874, %v873
  %v937 = vpack.c.b16 %v876, %v875
  %v938 = vpack.c.b16 %v878, %v877
  %v939 = vpack.c.b16 %v880, %v879
  %v940 = vpack.c.b16 %v882, %v881
  %v941 = vpack.c.b16 %v884, %v883
  %v942 = vpack.c.b16 %v886, %v885
  %v943 = vpack.c.b16 %v888, %v887
  %v944 = vpack.c.b16 %v890, %v889
  %v945 = vpack.c.b16 %v892, %v891
  %v946 = vpack.c.b16 %v894, %v893
  %v947 = vpack.c.b16 %v896, %v895
  %v948 = vpack.c.b16 %v898, %v897
  %v949 = vpack.c.b16 %v900, %v899
  %v950 = vpack.c.b16 %v902, %v901
  %v951 = vpack.c.b16 %v904, %v903
  %v952 = vpack.c.b16 %v906, %v905
  %v953 = vpack.c.b16 %v908, %v907
  %v954 = vpack.c.b16 %v910, %v909
  %v955 = vpack.c.b16 %v912, %v911
  %v956 = vpack.c.b16 %v914, %v913
  %v957 = vpack.c.b16 %v916, %v915
  %v958 = vpack.c.b16 %v918, %v917
  %v959 = vpack.c.b16 %v920, %v919
  %v960 = vpack.c.b16 %v922, %v921
  %v961 = vpack.c.b16 %v924, %v923
  %v962 = vpack.c.b16 %v926, %v925
  %v1000 = vsel %vm658, %v653, 0
  %v1003 = vsel %vm658, %v655, 0
  %v1006 = vsel %vm658, %v657, 0
  %1008 = vmatprep.subr.bf16.mxu0 0
  %1009 = vmatpush1.bf16.msra.mxu0 %v927
  %1010 = vmatprep.subr.bf16.mxu0 0
  %1011 = vmatpush1.bf16.msra.mxu0 %v928
  %1012 = vmatprep.subr.bf16.mxu0 0
  %1013 = vmatpush1.bf16.msra.mxu0 %v929
  %1014 = vmatprep.subr.bf16.mxu0 0
  %1015 = vmatpush1.bf16.msra.mxu0 %v930
  %1016 = vmatprep.subr.bf16.mxu0 0
  %1017 = vmatpush1.bf16.msra.mxu0 %v931
  %1018 = vmatprep.subr.bf16.mxu0 0
  %1019 = vmatpush1.bf16.msra.mxu0 %v932
  %1020 = vmatprep.subr.bf16.mxu0 0
  %1021 = vmatpush1.bf16.msra.mxu0 %v933
  %1022 = vmatprep.subr.bf16.mxu0 0
  %1023 = vmatpush1.bf16.msra.mxu0 %v934
  %1024 = vmatprep.subr.bf16.mxu0 0
  %1025 = vmatpush1.bf16.msra.mxu0 %v935
  %1026 = vmatprep.subr.bf16.mxu0 0
  %1027 = vmatpush1.bf16.msra.mxu0 %v936
  %1028 = vmatprep.subr.bf16.mxu0 0
  %1029 = vmatpush1.bf16.msra.mxu0 %v937
  %1030 = vmatprep.subr.bf16.mxu0 0
  %1031 = vmatpush1.bf16.msra.mxu0 %v938
  %1032 = vmatprep.subr.bf16.mxu0 0
  %1033 = vmatpush1.bf16.msra.mxu0 %v939
  %1034 = vmatprep.subr.bf16.mxu0 0
  %1035 = vmatpush1.bf16.msra.mxu0 %v940
  %1036 = vmatprep.subr.bf16.mxu0 0
  %1037 = vmatpush1.bf16.msra.mxu0 %v941
  %1038 = vmatprep.subr.bf16.mxu0 0
  %1039 = vmatpush1.bf16.msra.mxu0 %v942
  %1040 = vmatprep.mubr.bf16.mxu0 %v670
  %1041 = vmatmul.mubr.bf16.gmra.mrb[0].mxu0 %v660
  %v1042 = vpop.f32.mrb[0].mxu0
  %v1043 = vadd.f32 %v781, %v1042
  %v1044 = vpop.f32.mrb[0].mxu0
  %v1045 = vpop.f32.mrb[0].mxu0
  %v1046 = vadd.f32 %v781, %v1045
  %v1047 = vpop.f32.mrb[0].mxu0
  %1048 = vmatprep.mubr.bf16.mxu0 %v674
  %1049 = vmatmul.mubr.bf16.gmra.mrb[0].mxu0 %v663
  %v1050 = vpop.f32.mrb[0].mxu0
  %v1051 = vadd.f32 %v781, %v1050
  %v1052 = vpop.f32.mrb[0].mxu0
  %v1053 = vpop.f32.mrb[0].mxu0
  %v1054 = vadd.f32 %v781, %v1053
  %v1055 = vpop.f32.mrb[0].mxu0
  %1056 = vmatprep.mubr.bf16.mxu0 %v678
  %1057 = vmatmul.mubr.bf16.gmra.mrb[0].mxu0 %v666
  %v1058 = vpop.f32.mrb[0].mxu0
  %v1059 = vadd.f32 %v781, %v1058
  %v1060 = vpop.f32.mrb[0].mxu0
  %v1061 = vpop.f32.mrb[0].mxu0
  %v1062 = vadd.f32 %v781, %v1061
  %v1063 = vpop.f32.mrb[0].mxu0
  %1064 = vdwg.mxu0
  %1065 = vmatprep.subr.bf16.mxu0 0
  %1066 = vmatpush1.bf16.msra.mxu0 %v943
  %1067 = vmatprep.subr.bf16.mxu0 0
  %1068 = vmatpush1.bf16.msra.mxu0 %v944
  %1069 = vmatprep.subr.bf16.mxu0 0
  %1070 = vmatpush1.bf16.msra.mxu0 %v945
  %1071 = vmatprep.subr.bf16.mxu0 0
  %1072 = vmatpush1.bf16.msra.mxu0 %v946
  %1073 = vmatprep.subr.bf16.mxu0 0
  %1074 = vmatpush1.bf16.msra.mxu0 %v947
  %1075 = vmatprep.subr.bf16.mxu0 0
  %1076 = vmatpush1.bf16.msra.mxu0 %v948
  %1077 = vmatprep.subr.bf16.mxu0 0
  %1078 = vmatpush1.bf16.msra.mxu0 %v949
  %1079 = vmatprep.subr.bf16.mxu0 0
  %1080 = vmatpush1.bf16.msra.mxu0 %v950
  %1081 = vmatprep.subr.bf16.mxu0 0
  %1082 = vmatpush1.bf16.msra.mxu0 %v951
  %1083 = vmatprep.subr.bf16.mxu0 0
  %1084 = vmatpush1.bf16.msra.mxu0 %v952
  %1085 = vmatprep.subr.bf16.mxu0 0
  %1086 = vmatpush1.bf16.msra.mxu0 %v953
  %1087 = vmatprep.subr.bf16.mxu0 0
  %1088 = vmatpush1.bf16.msra.mxu0 %v954
  %1089 = vmatprep.subr.bf16.mxu0 0
  %1090 = vmatpush1.bf16.msra.mxu0 %v955
  %1091 = vmatprep.subr.bf16.mxu0 0
  %1092 = vmatpush1.bf16.msra.mxu0 %v956
  %1093 = vmatprep.subr.bf16.mxu0 0
  %1094 = vmatpush1.bf16.msra.mxu0 %v957
  %1095 = vmatprep.subr.bf16.mxu0 0
  %1096 = vmatpush1.bf16.msra.mxu0 %v958
  %1097 = vmatprep.mubr.bf16.mxu0 %v694
  %1098 = vmatmul.mubr.bf16.gmra.mrb[0].mxu0 %v682
  %v1099 = vpop.f32.mrb[0].mxu0
  %v1100 = vadd.f32 %v1043, %v1099
  %v1101 = vpop.f32.mrb[0].mxu0
  %v1102 = vpop.f32.mrb[0].mxu0
  %v1103 = vadd.f32 %v1046, %v1102
  %v1104 = vpop.f32.mrb[0].mxu0
  %1105 = vmatprep.mubr.bf16.mxu0 %v698
  %1106 = vmatmul.mubr.bf16.gmra.mrb[0].mxu0 %v686
  %v1107 = vpop.f32.mrb[0].mxu0
  %v1108 = vadd.f32 %v1051, %v1107
  %v1109 = vpop.f32.mrb[0].mxu0
  %v1110 = vpop.f32.mrb[0].mxu0
  %v1111 = vadd.f32 %v1054, %v1110
  %v1112 = vpop.f32.mrb[0].mxu0
  %1113 = vmatprep.mubr.bf16.mxu0 %v702
  %1114 = vmatmul.mubr.bf16.gmra.mrb[0].mxu0 %v690
  %v1115 = vpop.f32.mrb[0].mxu0
  %v1116 = vadd.f32 %v1059, %v1115
  %v1117 = vpop.f32.mrb[0].mxu0
  %v1118 = vpop.f32.mrb[0].mxu0
  %v1119 = vadd.f32 %v1062, %v1118
  %v1120 = vpop.f32.mrb[0].mxu0
  %1121 = vdwg.mxu0
  %1122 = vmatprep.subr.bf16.mxu0 0
  %1123 = vmatpush1.bf16.msra.mxu0 %v959
  %1124 = vmatprep.subr.bf16.mxu0 0
  %1125 = vmatpush1.bf16.msra.mxu0 %v960
  %1126 = vmatprep.subr.bf16.mxu0 0
  %1127 = vmatpush1.bf16.msra.mxu0 %v961
  %1128 = vmatprep.subr.bf16.mxu0 0
  %1129 = vmatpush1.bf16.msra.mxu0 %v962
  %1130 = vmatprep.subr.bf16.mxu0 0
  %1131 = vmatpush1.bf16.msra.mxu0 0
  %1132 = vmatprep.subr.bf16.mxu0 0
  %1133 = vmatpush1.bf16.msra.mxu0 0
  %1134 = vmatprep.subr.bf16.mxu0 0
  %1135 = vmatpush1.bf16.msra.mxu0 0
  %1136 = vmatprep.subr.bf16.mxu0 0
  %1137 = vmatpush1.bf16.msra.mxu0 0
  %1138 = vmatprep.subr.bf16.mxu0 0
  %1139 = vmatpush1.bf16.msra.mxu0 0
  %1140 = vmatprep.subr.bf16.mxu0 0
  %1141 = vmatpush1.bf16.msra.mxu0 0
  %1142 = vmatprep.subr.bf16.mxu0 0
  %1143 = vmatpush1.bf16.msra.mxu0 0
  %1144 = vmatprep.subr.bf16.mxu0 0
  %1145 = vmatpush1.bf16.msra.mxu0 0
  %1146 = vmatprep.subr.bf16.mxu0 0
  %1147 = vmatpush1.bf16.msra.mxu0 0
  %1148 = vmatprep.subr.bf16.mxu0 0
  %1149 = vmatpush1.bf16.msra.mxu0 0
  %1150 = vmatprep.subr.bf16.mxu0 0
  %1151 = vmatpush1.bf16.msra.mxu0 0
  %1152 = vmatprep.subr.bf16.mxu0 0
  %1153 = vmatpush1.bf16.msra.mxu0 0
  %1154 = vmatprep.mubr.bf16.mxu0 0
  %1155 = vmatmul.mubr.bf16.gmra.mrb[0].mxu0 %v1000
  %v1156 = vpop.f32.mrb[0].mxu0
  %v1157 = vadd.f32 %v1100, %v1156
  %v1158 = vpop.f32.mrb[0].mxu0
  %v1159 = vpop.f32.mrb[0].mxu0
  %v1160 = vadd.f32 %v1103, %v1159
  %v1161 = vpop.f32.mrb[0].mxu0
  %1162 = vmatprep.mubr.bf16.mxu0 0
  %1163 = vmatmul.mubr.bf16.gmra.mrb[0].mxu0 %v1003
  %v1164 = vpop.f32.mrb[0].mxu0
  %v1165 = vadd.f32 %v1108, %v1164
  %v1166 = vpop.f32.mrb[0].mxu0
  %v1167 = vpop.f32.mrb[0].mxu0
  %v1168 = vadd.f32 %v1111, %v1167
  %v1169 = vpop.f32.mrb[0].mxu0
  %1170 = vmatprep.mubr.bf16.mxu0 0
  %1171 = vmatmul.mubr.bf16.gmra.mrb[0].mxu0 %v1006
  %v1172 = vpop.f32.mrb[0].mxu0
  %v1173 = vadd.f32 %v1116, %v1172
  %v1174 = vpop.f32.mrb[0].mxu0
  %v1175 = vpop.f32.mrb[0].mxu0
  %v1176 = vadd.f32 %v1119, %v1175
  %v1177 = vpop.f32.mrb[0].mxu0
  %1178 = vdwg.mxu0
  %v1179 = vmax.f32 %v1157, 0.0
  %v1180 = vmax.f32 %v1160, 0.0
  %v1181 = vmax.f32 %v1165, 0.0
  %v1182 = vmax.f32 %v1168, 0.0
  %v1183 = vmax.f32 %v1173, 0.0
  %v1184 = vmax.f32 %v1176, 0.0
  %v1185 = vpack.c.bf16 %v1180, %v1179
  %v1186 = vpack.c.bf16 %v1182, %v1181
  %v1187 = vpack.c.bf16 %v1184, %v1183
  %v1191 = vunpack.c.l.b16 %v1185
  %v1192 = vunpack.c.h.b16 %v1185
  %v1193 = vunpack.c.l.b16 %v1186
  %v1194 = vunpack.c.h.b16 %v1186
  %v1195 = vunpack.c.l.b16 %v1187
  %v1196 = vunpack.c.h.b16 %v1187
  %v1197 = vpack.c.b16 %v1191, %v1191
  %v1198 = vpack.c.b16 %v1192, %v1192
  %v1199 = vpack.c.b16 %v1193, %v1193
  %v1200 = vpack.c.b16 %v1194, %v1194
  %v1201 = vpack.c.b16 %v1195, %v1195
  %v1202 = vpack.c.b16 %v1196, %v1196
  %vm1209 = vcmask 519168
  %1210 = vst.msk [vmem:[%s5] sm:$0xf] %vm1209, %v1197
  %1211 = vst.msk [vmem:[%s5 + $0x4] sm:$0xf] %vm1209, %v1198
  %1212 = vst.msk [vmem:[%s5 + $0x8] sm:$0xf] %vm1209, %v1199
  %1213 = vst.msk [vmem:[%s5 + $0xc] sm:$0xf] %vm1209, %v1200
  %1214 = vst.msk [vmem:[%s5 + $0x10] sm:$0xf] %vm1209, %v1201
  %vm1215 = vcmask 518144
  %1216 = vst.msk [vmem:[%s5 + $0x14] sm:$0x7] %vm1215, %v1202
  %vm1217 = vcmask 519171
  %1218 = vst.msk [vmem:[%s5 + $0x14] sm:$0x8] %vm1217, 0
  %1219 = vst.msk [vmem:[%s5 + $0x18] sm:$0xf] %vm1209, 0
  %1220 = vst.msk [vmem:[%s5 + $0x1c] sm:$0xf] %vm1209, 0
  // Predicated region
  $region22: #{nature_cnn_encoder_forward.4} parent=0 // pred_check
    _
  $region23: #{nature_cnn_encoder_forward.4} parent=0 // pred_check_branch
    %1222 = sbr.rel (0) target = $region25
  $region24: #{nature_cnn_encoder_forward.4} parent=0 // pred_region
    _
  $region25: #{nature_cnn_encoder_forward.4} parent=0 // pred_fallthru
    _
  // Predicated region
  $region26: #{nature_cnn_encoder_forward.4} parent=0 // pred_check
    _
  $region27: #{nature_cnn_encoder_forward.4} parent=0 // pred_check_branch
    %1224 = sbr.rel (0) target = $region29
  $region28: #{nature_cnn_encoder_forward.4} parent=0 // pred_region
    _
  $region29: #{nature_cnn_encoder_forward.4} parent=0 // pred_fallthru
    _

// kernel: nature_cnn_encoder_forward.5
$region0: #{nature_cnn_encoder_forward.5}
  #allocation0 [shape = 'u32[]', space=smem, size = 0x4, offset = 0x4, fixed_abs, tag = 'smem constant byte address 0x4 - core index']
  #allocation1 [shape = 'u32[144,128]{1,0:T(1,128)}', space=vmem, size = 0x12000, scoped, tag = 'internal scratch']
  %s0 = inlined_call_operand.vmem [shape: bf16[2,256], index: 0, kind: input, shape index: {}]
  %s1 = inlined_call_operand.vmem [shape: bf16[256,256], index: 1, kind: input, shape index: {}]
  %s2 = inlined_call_operand.vmem [shape: f32[1,256], index: 2, kind: input, shape index: {}]
  %s3 = inlined_call_operand.hbm [shape: f32[2,256], index: 3, kind: output, shape index: {}]
  %s4 = sld [smem:[#allocation0]]
  $region86: #{nature_cnn_encoder_forward.5} parent=0
    _
  %s6 = ssub.s32 1, %s4
  %s7 = scalar_select 0, %s6, %s4
  $region1: #{nature_cnn_encoder_forward.5} parent=0
    #allocation2 [shape = 'u8[131072]{0}', space=vmem, size = 0x20000, scoped, tag = 'input window, operand 1']
    #allocation3 [shape = 'u8[2048]{0}', space=vmem, size = 0x800, scoped, tag = 'output window, operand 0']
    #allocation4 [shape = 's32[2]{0}', space=sflag, size = 0x8, scoped, tag = 'scoped memory for nature_cnn_encoder_forward.5']
    %8 = vsyncpa [#allocation4], 0
    %s9 = scalar_lea.sflag [#allocation4], 1
    %10 = vsyncpa %s9, 0
    loop: start=0, step=1, limit=4
    $region2: #{nature_cnn_encoder_forward.5} parent=1 // loop_pre_header
      _
    $region3: #{nature_cnn_encoder_forward.5} parent=1 // loop_header
      %s12 = sphi 0, %s16
      %p13 = scmp.ge.s32.totalorder %s12, 4
      %s19 = sphi 0, %s31
      %s20 = sphi 0, %s27
      %s21 = sphi 0, %s19
      %s22 = sphi 0, %s20
      %s23 = sphi 0, %s21
      %s24 = sphi 0, %s22
      %s34 = sphi 0, %s36
      %s37 = sphi 0, %s34
      %s38 = sphi 0, %s37
      %s54 = sphi 0, %s38
      %s60 = sphi 0, %s62
      %s63 = sphi 0, %s60
      %s64 = sphi 0, %s63
      %s80 = sphi 0, %s64
      %s86 = sphi 0, %s88
      %s89 = sphi 0, %s86
      %s90 = sphi 0, %s89
      %s106 = sphi 0, %s90
      %s114 = sphi 0, %s116
      %s117 = sphi 0, %s114
      %s118 = sphi 0, %s117
      %s134 = sphi 0, %s118
    $region4: #{nature_cnn_encoder_forward.5} parent=1 // loop_header_branch
      %15 = sbr.rel (%p13) target = $region8
    $region5: #{nature_cnn_encoder_forward.5} parent=1 // loop_body
      %s17 = ssub.s32 %s12, 1
      %s18 = ssub.s32 %s12, 2
      %s25 = sadd.s32 1, %s20
      %p26 = scmp.ge.s32.totalorder %s25, 2
      %s27 = scalar_select %p26, 0, %s25
      %s28 = sadd.s32 1, %s19
      %s29 = scalar_select %p26, %s28, %s19
      %p30 = scmp.ge.s32.totalorder %s29, 1
      %s31 = scalar_select %p30, 0, %s29
      %s32 = ssub.s32 %s19, %s31
      %p33 = scmp.eq.s32.totalorder %s32, 0
      %s35 = sadd.s32 %s34, 1
      %s36 = scalar_select %p33, %s34, %s35
      %p39 = pneg %p33
      %p40 = scmp.eq.s32.totalorder %s12, 1
      %p41 = por %p39, %p40
      %p42 = scmp.ne.s32.totalorder %s34, %s37
      %p43 = scmp.eq.s32.totalorder %s12, 0
      %p44 = por %p42, %p43
      %p45 = scmp.ne.s32.totalorder %s34, %s37
      %p46 = scmp.eq.s32.totalorder %s17, 1
      %p47 = por %p45, %p46
      %p48 = scmp.ne.s32.totalorder %s37, %s38
      %p49 = scmp.eq.s32.totalorder %s17, 0
      %p50 = por %p48, %p49
      %p51 = scmp.ne.s32.totalorder %s37, %s38
      %p52 = scmp.eq.s32.totalorder %s18, 1
      %p53 = por %p51, %p52
      %p55 = scmp.ne.s32.totalorder %s38, %s54
      %p56 = scmp.eq.s32.totalorder %s18, 0
      %p57 = por %p55, %p56
      %s58 = ssub.s32 %s20, %s27
      %p59 = scmp.eq.s32.totalorder %s58, 0
      %s61 = sadd.s32 %s60, 1
      %s62 = scalar_select %p59, %s60, %s61
      %p65 = pneg %p59
      %p66 = scmp.eq.s32.totalorder %s12, 1
      %p67 = por %p65, %p66
      %p68 = scmp.ne.s32.totalorder %s60, %s63
      %p69 = scmp.eq.s32.totalorder %s12, 0
      %p70 = por %p68, %p69
      %p71 = scmp.ne.s32.totalorder %s60, %s63
      %p72 = scmp.eq.s32.totalorder %s17, 1
      %p73 = por %p71, %p72
      %p74 = scmp.ne.s32.totalorder %s63, %s64
      %p75 = scmp.eq.s32.totalorder %s17, 0
      %p76 = por %p74, %p75
      %p77 = scmp.ne.s32.totalorder %s63, %s64
      %p78 = scmp.eq.s32.totalorder %s18, 1
      %p79 = por %p77, %p78
      %p81 = scmp.ne.s32.totalorder %s64, %s80
      %p82 = scmp.eq.s32.totalorder %s18, 0
      %p83 = por %p81, %p82
      %s84 = ssub.s32 %s20, %s27
      %p85 = scmp.eq.s32.totalorder %s84, 0
      %s87 = sadd.s32 %s86, 1
      %s88 = scalar_select %p85, %s86, %s87
      %p91 = pneg %p85
      %p92 = scmp.eq.s32.totalorder %s12, 1
      %p93 = por %p91, %p92
      %p94 = scmp.ne.s32.totalorder %s86, %s89
      %p95 = scmp.eq.s32.totalorder %s12, 0
      %p96 = por %p94, %p95
      %p97 = scmp.ne.s32.totalorder %s86, %s89
      %p98 = scmp.eq.s32.totalorder %s17, 1
      %p99 = por %p97, %p98
      %p100 = scmp.ne.s32.totalorder %s89, %s90
      %p101 = scmp.eq.s32.totalorder %s17, 0
      %p102 = por %p100, %p101
      %p103 = scmp.ne.s32.totalorder %s89, %s90
      %p104 = scmp.eq.s32.totalorder %s18, 1
      %p105 = por %p103, %p104
      %p107 = scmp.ne.s32.totalorder %s90, %s106
      %p108 = scmp.eq.s32.totalorder %s18, 0
      %p109 = por %p107, %p108
      %s110 = ssub.s32 %s19, %s31
      %s111 = ssub.s32 %s20, %s27
      %s112 = sor.u32 %s110, %s111
      %p113 = scmp.eq.s32.totalorder %s112, 0
      %s115 = sadd.s32 %s114, 1
      %s116 = scalar_select %p113, %s114, %s115
      %p119 = pneg %p113
      %p120 = scmp.eq.s32.totalorder %s12, 1
      %p121 = por %p119, %p120
      %p122 = scmp.ne.s32.totalorder %s114, %s117
      %p123 = scmp.eq.s32.totalorder %s12, 0
      %p124 = por %p122, %p123
      %p125 = scmp.ne.s32.totalorder %s114, %s117
      %p126 = scmp.eq.s32.totalorder %s17, 1
      %p127 = por %p125, %p126
      %p128 = scmp.ne.s32.totalorder %s117, %s118
      %p129 = scmp.eq.s32.totalorder %s17, 0
      %p130 = por %p128, %p129
      %p131 = scmp.ne.s32.totalorder %s117, %s118
      %p132 = scmp.eq.s32.totalorder %s18, 1
      %p133 = por %p131, %p132
      %p135 = scmp.ne.s32.totalorder %s118, %s134
      %p136 = scmp.eq.s32.totalorder %s18, 0
      %p137 = por %p135, %p136
      %p138 = scmp.le.s32.totalorder 1, %s12
      %p139 = scmp.lt.s32.totalorder %s12, 3
      %p140 = pnand %p138, %p139
      %p141 = pneg %p140
      // Predicated region
      $region9: #{nature_cnn_encoder_forward.5} parent=5 // pred_check
        _
      $region10: #{nature_cnn_encoder_forward.5} parent=5 // pred_check_branch
        %143 = sbr.rel (%p140) target = $region12
      $region11: #{nature_cnn_encoder_forward.5} parent=5 // pred_region
        %s144 = ssub.s32 %s12, 1
        // Predicated region
        $region13: #{nature_cnn_encoder_forward.5} parent=11 // pred_check
          %p145 = pneg %p50
        $region14: #{nature_cnn_encoder_forward.5} parent=11 // pred_check_branch
          %147 = sbr.rel (%p145) target = $region16
        $region15: #{nature_cnn_encoder_forward.5} parent=11 // pred_region
          %p148 = scmp.lt.s32.totalorder %s21, 0
          %s149 = scalar_select %p148, %s21, 0
          %s150 = smul.addr %s149, 2
          %s151 = scalar_lea.vmem %s0, %s150
        $region16: #{nature_cnn_encoder_forward.5} parent=11 // pred_fallthru
          _
      $region12: #{nature_cnn_encoder_forward.5} parent=5 // pred_fallthru
        _
      %p152 = scmp.lt.s32.totalorder %s12, 2
      // Predicated region
      $region17: #{nature_cnn_encoder_forward.5} parent=5 // pred_check
        %p153 = pneg %p152
      $region18: #{nature_cnn_encoder_forward.5} parent=5 // pred_check_branch
        %155 = sbr.rel (%p153) target = $region20
      $region19: #{nature_cnn_encoder_forward.5} parent=5 // pred_region
        // Predicated region
        $region21: #{nature_cnn_encoder_forward.5} parent=19 // pred_check
          %p156 = pneg %p70
        $region22: #{nature_cnn_encoder_forward.5} parent=19 // pred_check_branch
          %158 = sbr.rel (%p156) target = $region24
        $region23: #{nature_cnn_encoder_forward.5} parent=19 // pred_region
          %s159 = sand.u32 %s60, 1
          %s160 = sand.u32 %s60, 1
          %s161 = smul.addr %s160, 128
          %s162 = scalar_lea.vmem [#allocation2], %s161
          %s163 = smul.addr %s20, 4
          %s164 = scalar_lea.vmem %s1, %s163
          // Predicated region
          $region25: #{nature_cnn_encoder_forward.5} parent=23 // pred_check
            _
          $region26: #{nature_cnn_encoder_forward.5} parent=23 // pred_check_branch
            %166 = sbr.rel (0) target = $region28
          $region27: #{nature_cnn_encoder_forward.5} parent=23 // pred_region
            // Predicated region
            $region29: #{nature_cnn_encoder_forward.5} parent=27 // pred_check
              _
            $region30: #{nature_cnn_encoder_forward.5} parent=27 // pred_check_branch
              %168 = sbr.rel target = $region32
            $region31: #{nature_cnn_encoder_forward.5} parent=27 // pred_region
              // Predicated region
              $region44: #{nature_cnn_encoder_forward.5} parent=31 // pred_check
                _
              $region45: #{nature_cnn_encoder_forward.5} parent=31 // pred_check_branch
                %245 = sbr.rel (0) target = $region47
              $region46: #{nature_cnn_encoder_forward.5} parent=31 // pred_region
                loop: start=0, step=1, limit=1
                $region48: #{nature_cnn_encoder_forward.5} parent=46 // loop_pre_header
                  _
                $region49: #{nature_cnn_encoder_forward.5} parent=46 // loop_header
                  %s247 = sphi 0, %s251
                  %p248 = scmp.ge.s32.totalorder %s247, 1
                  %s252 = sphi %s164, %s164
                  %s253 = sphi %s162, %s162
                $region50: #{nature_cnn_encoder_forward.5} parent=46 // loop_header_branch
                  %250 = sbr.rel (%p248) target = $region54
                $region51: #{nature_cnn_encoder_forward.5} parent=46 // loop_body
                  _
                $region52: #{nature_cnn_encoder_forward.5} parent=46 // loop_footer
                  %s251 = sadd.s32 1, %s247
                $region53: #{nature_cnn_encoder_forward.5} parent=46 // loop_footer_branch
                  %246 = sbr.rel target = $region49
                $region54: #{nature_cnn_encoder_forward.5} parent=46 // loop_exit
                  _
                loop: start=0, step=1, limit=1
                $region55: #{nature_cnn_encoder_forward.5} parent=46 // loop_pre_header
                  _
                $region56: #{nature_cnn_encoder_forward.5} parent=46 // loop_header
                  %s256 = sphi 0, %s260
                  %p257 = scmp.ge.s32.totalorder %s256, 1
                  %s261 = sphi %s164, %s164
                  %s262 = sphi %s162, %s162
                $region57: #{nature_cnn_encoder_forward.5} parent=46 // loop_header_branch
                  %259 = sbr.rel (%p257) target = $region61
                $region58: #{nature_cnn_encoder_forward.5} parent=46 // loop_body
                  %v263 = vld [vmem:[%s261] sm:$0xf]
                  %264 = vst [vmem:[%s262] sm:$0xf] %v263
                  %v265 = vld [vmem:[%s261 + $0x8] sm:$0xf]
                  %266 = vst [vmem:[%s262 + $0x4] sm:$0xf] %v265
                  %v267 = vld [vmem:[%s261 + $0x10] sm:$0xf]
                  %268 = vst [vmem:[%s262 + $0x8] sm:$0xf] %v267
                  %v269 = vld [vmem:[%s261 + $0x18] sm:$0xf]
                  %270 = vst [vmem:[%s262 + $0xc] sm:$0xf] %v269
                  %v271 = vld [vmem:[%s261 + $0x20] sm:$0xf]
                  %272 = vst [vmem:[%s262 + $0x10] sm:$0xf] %v271
                  %v273 = vld [vmem:[%s261 + $0x28] sm:$0xf]
                  %274 = vst [vmem:[%s262 + $0x14] sm:$0xf] %v273
                  %v275 = vld [vmem:[%s261 + $0x30] sm:$0xf]
                  %276 = vst [vmem:[%s262 + $0x18] sm:$0xf] %v275
                  %v277 = vld [vmem:[%s261 + $0x38] sm:$0xf]
                  %278 = vst [vmem:[%s262 + $0x1c] sm:$0xf] %v277
                  %v279 = vld [vmem:[%s261 + $0x40] sm:$0xf]
                  %280 = vst [vmem:[%s262 + $0x20] sm:$0xf] %v279
                  %v281 = vld [vmem:[%s261 + $0x48] sm:$0xf]
                  %282 = vst [vmem:[%s262 + $0x24] sm:$0xf] %v281
                  %v283 = vld [vmem:[%s261 + $0x50] sm:$0xf]
                  %284 = vst [vmem:[%s262 + $0x28] sm:$0xf] %v283
                  %v285 = vld [vmem:[%s261 + $0x58] sm:$0xf]
                  %286 = vst [vmem:[%s262 + $0x2c] sm:$0xf] %v285
                  %v287 = vld [vmem:[%s261 + $0x60] sm:$0xf]
                  %288 = vst [vmem:[%s262 + $0x30] sm:$0xf] %v287
                  %v289 = vld [vmem:[%s261 + $0x68] sm:$0xf]
                  %290 = vst [vmem:[%s262 + $0x34] sm:$0xf] %v289
                  %v291 = vld [vmem:[%s261 + $0x70] sm:$0xf]
                  %292 = vst [vmem:[%s262 + $0x38] sm:$0xf] %v291
                  %v293 = vld [vmem:[%s261 + $0x78] sm:$0xf]
                  %294 = vst [vmem:[%s262 + $0x3c] sm:$0xf] %v293
                  %v295 = vld [vmem:[%s261 + $0x80] sm:$0xf]
                  %296 = vst [vmem:[%s262 + $0x40] sm:$0xf] %v295
                  %v297 = vld [vmem:[%s261 + $0x88] sm:$0xf]
                  %298 = vst [vmem:[%s262 + $0x44] sm:$0xf] %v297
                  %v299 = vld [vmem:[%s261 + $0x90] sm:$0xf]
                  %300 = vst [vmem:[%s262 + $0x48] sm:$0xf] %v299
                  %v301 = vld [vmem:[%s261 + $0x98] sm:$0xf]
                  %302 = vst [vmem:[%s262 + $0x4c] sm:$0xf] %v301
                  %v303 = vld [vmem:[%s261 + $0xa0] sm:$0xf]
                  %304 = vst [vmem:[%s262 + $0x50] sm:$0xf] %v303
                  %v305 = vld [vmem:[%s261 + $0xa8] sm:$0xf]
                  %306 = vst [vmem:[%s262 + $0x54] sm:$0xf] %v305
                  %v307 = vld [vmem:[%s261 + $0xb0] sm:$0xf]
                  %308 = vst [vmem:[%s262 + $0x58] sm:$0xf] %v307
                  %v309 = vld [vmem:[%s261 + $0xb8] sm:$0xf]
                  %310 = vst [vmem:[%s262 + $0x5c] sm:$0xf] %v309
                  %v311 = vld [vmem:[%s261 + $0xc0] sm:$0xf]
                  %312 = vst [vmem:[%s262 + $0x60] sm:$0xf] %v311
                  %v313 = vld [vmem:[%s261 + $0xc8] sm:$0xf]
                  %314 = vst [vmem:[%s262 + $0x64] sm:$0xf] %v313
                  %v315 = vld [vmem:[%s261 + $0xd0] sm:$0xf]
                  %316 = vst [vmem:[%s262 + $0x68] sm:$0xf] %v315
                  %v317 = vld [vmem:[%s261 + $0xd8] sm:$0xf]
                  %318 = vst [vmem:[%s262 + $0x6c] sm:$0xf] %v317
                  %v319 = vld [vmem:[%s261 + $0xe0] sm:$0xf]
                  %320 = vst [vmem:[%s262 + $0x70] sm:$0xf] %v319
                  %v321 = vld [vmem:[%s261 + $0xe8] sm:$0xf]
                  %322 = vst [vmem:[%s262 + $0x74] sm:$0xf] %v321
                  %v323 = vld [vmem:[%s261 + $0xf0] sm:$0xf]
                  %324 = vst [vmem:[%s262 + $0x78] sm:$0xf] %v323
                  %v325 = vld [vmem:[%s261 + $0xf8] sm:$0xf]
                  %326 = vst [vmem:[%s262 + $0x7c] sm:$0xf] %v325
                $region59: #{nature_cnn_encoder_forward.5} parent=46 // loop_footer
                  %s260 = sadd.s32 1, %s256
                $region60: #{nature_cnn_encoder_forward.5} parent=46 // loop_footer_branch
                  %255 = sbr.rel target = $region56
                $region61: #{nature_cnn_encoder_forward.5} parent=46 // loop_exit
                  _
              $region47: #{nature_cnn_encoder_forward.5} parent=31 // pred_fallthru
                _
            $region32: #{nature_cnn_encoder_forward.5} parent=27 // pred_fallthru
              _
            // Predicated region
            $region33: #{nature_cnn_encoder_forward.5} parent=27 // pred_check
              _
            $region34: #{nature_cnn_encoder_forward.5} parent=27 // pred_check_branch
              %170 = sbr.rel (0) target = $region36
            $region35: #{nature_cnn_encoder_forward.5} parent=27 // pred_region
              loop: start=0, step=1, limit=1
              $region37: #{nature_cnn_encoder_forward.5} parent=35 // loop_pre_header
                _
              $region38: #{nature_cnn_encoder_forward.5} parent=35 // loop_header
                %s173 = sphi 0, %s177
                %p174 = scmp.ge.s32.totalorder %s173, 1
                %s178 = sphi %s164, %s164
                %s179 = sphi %s162, %s162
              $region39: #{nature_cnn_encoder_forward.5} parent=35 // loop_header_branch
                %176 = sbr.rel (%p174) target = $region43
              $region40: #{nature_cnn_encoder_forward.5} parent=35 // loop_body
                %v180 = vld [vmem:[%s178] sm:$0xf]
                %181 = vst [vmem:[%s179] sm:$0xf] %v180
                %v182 = vld [vmem:[%s178 + $0x8] sm:$0xf]
                %183 = vst [vmem:[%s179 + $0x4] sm:$0xf] %v182
                %v184 = vld [vmem:[%s178 + $0x10] sm:$0xf]
                %185 = vst [vmem:[%s179 + $0x8] sm:$0xf] %v184
                %v186 = vld [vmem:[%s178 + $0x18] sm:$0xf]
                %187 = vst [vmem:[%s179 + $0xc] sm:$0xf] %v186
                %v188 = vld [vmem:[%s178 + $0x20] sm:$0xf]
                %189 = vst [vmem:[%s179 + $0x10] sm:$0xf] %v188
                %v190 = vld [vmem:[%s178 + $0x28] sm:$0xf]
                %191 = vst [vmem:[%s179 + $0x14] sm:$0xf] %v190
                %v192 = vld [vmem:[%s178 + $0x30] sm:$0xf]
                %193 = vst [vmem:[%s179 + $0x18] sm:$0xf] %v192
                %v194 = vld [vmem:[%s178 + $0x38] sm:$0xf]
                %195 = vst [vmem:[%s179 + $0x1c] sm:$0xf] %v194
                %v196 = vld [vmem:[%s178 + $0x40] sm:$0xf]
                %197 = vst [vmem:[%s179 + $0x20] sm:$0xf] %v196
                %v198 = vld [vmem:[%s178 + $0x48] sm:$0xf]
                %199 = vst [vmem:[%s179 + $0x24] sm:$0xf] %v198
                %v200 = vld [vmem:[%s178 + $0x50] sm:$0xf]
                %201 = vst [vmem:[%s179 + $0x28] sm:$0xf] %v200
                %v202 = vld [vmem:[%s178 + $0x58] sm:$0xf]
                %203 = vst [vmem:[%s179 + $0x2c] sm:$0xf] %v202
                %v204 = vld [vmem:[%s178 + $0x60] sm:$0xf]
                %205 = vst [vmem:[%s179 + $0x30] sm:$0xf] %v204
                %v206 = vld [vmem:[%s178 + $0x68] sm:$0xf]
                %207 = vst [vmem:[%s179 + $0x34] sm:$0xf] %v206
                %v208 = vld [vmem:[%s178 + $0x70] sm:$0xf]
                %209 = vst [vmem:[%s179 + $0x38] sm:$0xf] %v208
                %v210 = vld [vmem:[%s178 + $0x78] sm:$0xf]
                %211 = vst [vmem:[%s179 + $0x3c] sm:$0xf] %v210
                %v212 = vld [vmem:[%s178 + $0x80] sm:$0xf]
                %213 = vst [vmem:[%s179 + $0x40] sm:$0xf] %v212
                %v214 = vld [vmem:[%s178 + $0x88] sm:$0xf]
                %215 = vst [vmem:[%s179 + $0x44] sm:$0xf] %v214
                %v216 = vld [vmem:[%s178 + $0x90] sm:$0xf]
                %217 = vst [vmem:[%s179 + $0x48] sm:$0xf] %v216
                %v218 = vld [vmem:[%s178 + $0x98] sm:$0xf]
                %219 = vst [vmem:[%s179 + $0x4c] sm:$0xf] %v218
                %v220 = vld [vmem:[%s178 + $0xa0] sm:$0xf]
                %221 = vst [vmem:[%s179 + $0x50] sm:$0xf] %v220
                %v222 = vld [vmem:[%s178 + $0xa8] sm:$0xf]
                %223 = vst [vmem:[%s179 + $0x54] sm:$0xf] %v222
                %v224 = vld [vmem:[%s178 + $0xb0] sm:$0xf]
                %225 = vst [vmem:[%s179 + $0x58] sm:$0xf] %v224
                %v226 = vld [vmem:[%s178 + $0xb8] sm:$0xf]
                %227 = vst [vmem:[%s179 + $0x5c] sm:$0xf] %v226
                %v228 = vld [vmem:[%s178 + $0xc0] sm:$0xf]
                %229 = vst [vmem:[%s179 + $0x60] sm:$0xf] %v228
                %v230 = vld [vmem:[%s178 + $0xc8] sm:$0xf]
                %231 = vst [vmem:[%s179 + $0x64] sm:$0xf] %v230
                %v232 = vld [vmem:[%s178 + $0xd0] sm:$0xf]
                %233 = vst [vmem:[%s179 + $0x68] sm:$0xf] %v232
                %v234 = vld [vmem:[%s178 + $0xd8] sm:$0xf]
                %235 = vst [vmem:[%s179 + $0x6c] sm:$0xf] %v234
                %v236 = vld [vmem:[%s178 + $0xe0] sm:$0xf]
                %237 = vst [vmem:[%s179 + $0x70] sm:$0xf] %v236
                %v238 = vld [vmem:[%s178 + $0xe8] sm:$0xf]
                %239 = vst [vmem:[%s179 + $0x74] sm:$0xf] %v238
                %v240 = vld [vmem:[%s178 + $0xf0] sm:$0xf]
                %241 = vst [vmem:[%s179 + $0x78] sm:$0xf] %v240
                %v242 = vld [vmem:[%s178 + $0xf8] sm:$0xf]
                %243 = vst [vmem:[%s179 + $0x7c] sm:$0xf] %v242
              $region41: #{nature_cnn_encoder_forward.5} parent=35 // loop_footer
                %s177 = sadd.s32 1, %s173
              $region42: #{nature_cnn_encoder_forward.5} parent=35 // loop_footer_branch
                %172 = sbr.rel target = $region38
              $region43: #{nature_cnn_encoder_forward.5} parent=35 // loop_exit
                _
            $region36: #{nature_cnn_encoder_forward.5} parent=27 // pred_fallthru
              _
          $region28: #{nature_cnn_encoder_forward.5} parent=23 // pred_fallthru
            _
          %327 = vnop
        $region24: #{nature_cnn_encoder_forward.5} parent=19 // pred_fallthru
          _
        // Predicated region
        $region62: #{nature_cnn_encoder_forward.5} parent=19 // pred_check
          %p328 = pneg %p96
        $region63: #{nature_cnn_encoder_forward.5} parent=19 // pred_check_branch
          %330 = sbr.rel (%p328) target = $region65
        $region64: #{nature_cnn_encoder_forward.5} parent=19 // pred_region
          %p331 = scmp.lt.s32.totalorder %s20, 1
          %s332 = scalar_select %p331, %s20, 1
          %s333 = scalar_lea.vmem %s2, %s332
        $region65: #{nature_cnn_encoder_forward.5} parent=19 // pred_fallthru
          _
      $region20: #{nature_cnn_encoder_forward.5} parent=5 // pred_fallthru
        _
      %p334 = scmp.le.s32.totalorder 1, %s12
      %p335 = scmp.lt.s32.totalorder %s12, 3
      %p336 = pnand %p334, %p335
      %p337 = pneg %p336
      // Predicated region
      $region66: #{nature_cnn_encoder_forward.5} parent=5 // pred_check
        _
      $region67: #{nature_cnn_encoder_forward.5} parent=5 // pred_check_branch
        %339 = sbr.rel (%p336) target = $region69
      $region68: #{nature_cnn_encoder_forward.5} parent=5 // pred_region
        %s340 = ssub.s32 %s12, 1
        %s341 = sand.u32 %s63, 1
        %s342 = sand.u32 %s63, 1
        %s343 = smul.addr %s342, 128
        %s344 = scalar_lea.vmem [#allocation2], %s343
        // Predicated region
        $region70: #{nature_cnn_encoder_forward.5} parent=68 // pred_check
          %p345 = pneg %p76
        $region71: #{nature_cnn_encoder_forward.5} parent=68 // pred_check_branch
          %347 = sbr.rel (%p345) target = $region73
        $region72: #{nature_cnn_encoder_forward.5} parent=68 // pred_region
          _
        $region73: #{nature_cnn_encoder_forward.5} parent=68 // pred_fallthru
          _
        %p348 = scmp.lt.s32.totalorder %s21, 0
        %s349 = scalar_select %p348, %s21, 0
        %s350 = smul.addr %s349, 2
        %s351 = scalar_lea.vmem %s0, %s350
        %p352 = pneg %p50
        %p353 = pneg %p47
        %s354 = sand.u32 %s63, 1
        %s355 = sand.u32 %s63, 1
        %s356 = smul.addr %s355, 128
        %s357 = scalar_lea.vmem [#allocation2], %s356
        %p358 = pneg %p76
        %p359 = pneg %p73
        %p360 = scmp.lt.s32.totalorder %s22, 1
        %s361 = scalar_select %p360, %s22, 1
        %s362 = scalar_lea.vmem %s2, %s361
        %p363 = pneg %p102
        %p364 = pneg %p99
        %p365 = pneg %p130
        %p366 = pneg %p127
        %s367 = sand.u32 %s117, 1
        %s368 = scalar_lea.sflag [#allocation4], %s367
        %s369 = sand.u32 %s117, 1
        %s370 = smul.addr %s369, 2
        %s371 = scalar_lea.vmem [#allocation3], %s370
        %p372 = scmp.lt.s32.totalorder %s21, 0
        %s373 = scalar_select %p372, %s21, 0
        %s374 = smul.addr %s373, 2
        %s375 = scalar_lea.vmem %s0, %s374
        %p376 = scmp.lt.s32.totalorder %s22, 1
        %s377 = scalar_select %p376, %s22, 1
        %s378 = scalar_lea.vmem %s2, %s377
        %v380 = vld [vmem:[%s375] sm:$0x3]
        %v381 = vld [vmem:[%s344] sm:$0xf]
        %v382 = vld [vmem:[%s344 + $0x4] sm:$0xf]
        %v383 = vld [vmem:[%s344 + $0x8] sm:$0xf]
        %v384 = vld [vmem:[%s344 + $0xc] sm:$0xf]
        %v385 = vld [vmem:[%s344 + $0x10] sm:$0xf]
        %v386 = vld [vmem:[%s344 + $0x14] sm:$0xf]
        %v387 = vld [vmem:[%s344 + $0x18] sm:$0xf]
        %v388 = vld [vmem:[%s344 + $0x1c] sm:$0xf]
        %v389 = vld [vmem:[%s344 + $0x20] sm:$0xf]
        %v390 = vld [vmem:[%s344 + $0x24] sm:$0xf]
        %v391 = vld [vmem:[%s344 + $0x28] sm:$0xf]
        %v392 = vld [vmem:[%s344 + $0x2c] sm:$0xf]
        %v393 = vld [vmem:[%s344 + $0x30] sm:$0xf]
        %v394 = vld [vmem:[%s344 + $0x34] sm:$0xf]
        %v395 = vld [vmem:[%s344 + $0x38] sm:$0xf]
        %v396 = vld [vmem:[%s344 + $0x3c] sm:$0xf]
        %v397 = vld [vmem:[%s344 + $0x40] sm:$0xf]
        %v398 = vld [vmem:[%s344 + $0x44] sm:$0xf]
        %v399 = vld [vmem:[%s344 + $0x48] sm:$0xf]
        %v400 = vld [vmem:[%s344 + $0x4c] sm:$0xf]
        %v401 = vld [vmem:[%s344 + $0x50] sm:$0xf]
        %v402 = vld [vmem:[%s344 + $0x54] sm:$0xf]
        %v403 = vld [vmem:[%s344 + $0x58] sm:$0xf]
        %v404 = vld [vmem:[%s344 + $0x5c] sm:$0xf]
        %v405 = vld [vmem:[%s344 + $0x60] sm:$0xf]
        %v406 = vld [vmem:[%s344 + $0x64] sm:$0xf]
        %v407 = vld [vmem:[%s344 + $0x68] sm:$0xf]
        %v408 = vld [vmem:[%s344 + $0x6c] sm:$0xf]
        %v409 = vld [vmem:[%s344 + $0x70] sm:$0xf]
        %v410 = vld [vmem:[%s344 + $0x74] sm:$0xf]
        %v411 = vld [vmem:[%s344 + $0x78] sm:$0xf]
        %v412 = vld [vmem:[%s344 + $0x7c] sm:$0xf]
        %v413 = vld [vmem:[%s378] sm:$0x1]
        %v415 = vlaneseq
        %v416 = vshrl.u32 %v415, 7
        %v417 = vsub.s32 0, %v416
        %v418 = vrot.slane %v413, %v417
        %v422 = vunpack.c.l.s4 1966171168
        %v423 = vunpack.c.0.s8 %v422
        %v424 = vlaneseq
        %v425 = vshrl.u32 %v424, 7
        %v426 = vsub.s32 %v423, %v425
        %v427 = vrot.slane %v380, %v426
        %v428 = vcombine.high %v427, %v427
        %v430 = vunpack.c.l.s4 1966171168
        %v431 = vunpack.c.0.s8 %v430
        %v432 = vlaneseq
        %v433 = vshrl.u32 %v432, 7
        %v434 = vsub.s32 %v431, %v433
        %v435 = vrot.slane %v427, %v434
        %v437 = vunpack.c.l.s4 1966171168
        %v438 = vunpack.c.0.s8 %v437
        %v439 = vlaneseq
        %v440 = vshrl.u32 %v439, 7
        %v441 = vsub.s32 %v438, %v440
        %v442 = vrot.slane %v428, %v441
        %v477 = vunpack.c.l.b16 %v381
        %v478 = vunpack.c.l.b16 %v382
        %v479 = vunpack.c.l.b16 %v383
        %v480 = vunpack.c.l.b16 %v384
        %v481 = vunpack.c.l.b16 %v385
        %v482 = vunpack.c.l.b16 %v386
        %v483 = vunpack.c.l.b16 %v387
        %v484 = vunpack.c.l.b16 %v388
        %v485 = vunpack.c.l.b16 %v389
        %v486 = vunpack.c.l.b16 %v390
        %v487 = vunpack.c.l.b16 %v391
        %v488 = vunpack.c.l.b16 %v392
        %v489 = vunpack.c.l.b16 %v393
        %v490 = vunpack.c.l.b16 %v394
        %v491 = vunpack.c.l.b16 %v395
        %v492 = vunpack.c.l.b16 %v396
        %v493 = vunpack.c.l.b16 %v397
        %v494 = vunpack.c.l.b16 %v398
        %v495 = vunpack.c.l.b16 %v399
        %v496 = vunpack.c.l.b16 %v400
        %v497 = vunpack.c.l.b16 %v401
        %v498 = vunpack.c.l.b16 %v402
        %v499 = vunpack.c.l.b16 %v403
        %v500 = vunpack.c.l.b16 %v404
        %v501 = vunpack.c.l.b16 %v405
        %v502 = vunpack.c.l.b16 %v406
        %v503 = vunpack.c.l.b16 %v407
        %v504 = vunpack.c.l.b16 %v408
        %v505 = vunpack.c.l.b16 %v409
        %v506 = vunpack.c.l.b16 %v410
        %v507 = vunpack.c.l.b16 %v411
        %v508 = vunpack.c.l.b16 %v412
        %v509 = vpack.c.b16 %v478, %v477
        %v510 = vpack.c.b16 %v480, %v479
        %v511 = vpack.c.b16 %v482, %v481
        %v512 = vpack.c.b16 %v484, %v483
        %v513 = vpack.c.b16 %v486, %v485
        %v514 = vpack.c.b16 %v488, %v487
        %v515 = vpack.c.b16 %v490, %v489
        %v516 = vpack.c.b16 %v492, %v491
        %v517 = vpack.c.b16 %v494, %v493
        %v518 = vpack.c.b16 %v496, %v495
        %v519 = vpack.c.b16 %v498, %v497
        %v520 = vpack.c.b16 %v500, %v499
        %v521 = vpack.c.b16 %v502, %v501
        %v522 = vpack.c.b16 %v504, %v503
        %v523 = vpack.c.b16 %v506, %v505
        %v524 = vpack.c.b16 %v508, %v507
        %541 = vmatprep.subr.bf16.mxu0 0
        %542 = vmatpush1.bf16.msra.mxu0 %v509
        %543 = vmatprep.subr.bf16.mxu0 0
        %544 = vmatpush1.bf16.msra.mxu0 %v510
        %545 = vmatprep.subr.bf16.mxu0 0
        %546 = vmatpush1.bf16.msra.mxu0 %v511
        %547 = vmatprep.subr.bf16.mxu0 0
        %548 = vmatpush1.bf16.msra.mxu0 %v512
        %549 = vmatprep.subr.bf16.mxu0 0
        %550 = vmatpush1.bf16.msra.mxu0 %v513
        %551 = vmatprep.subr.bf16.mxu0 0
        %552 = vmatpush1.bf16.msra.mxu0 %v514
        %553 = vmatprep.subr.bf16.mxu0 0
        %554 = vmatpush1.bf16.msra.mxu0 %v515
        %555 = vmatprep.subr.bf16.mxu0 0
        %556 = vmatpush1.bf16.msra.mxu0 %v516
        %557 = vmatprep.subr.bf16.mxu0 0
        %558 = vmatpush1.bf16.msra.mxu0 %v517
        %559 = vmatprep.subr.bf16.mxu0 0
        %560 = vmatpush1.bf16.msra.mxu0 %v518
        %561 = vmatprep.subr.bf16.mxu0 0
        %562 = vmatpush1.bf16.msra.mxu0 %v519
        %563 = vmatprep.subr.bf16.mxu0 0
        %564 = vmatpush1.bf16.msra.mxu0 %v520
        %565 = vmatprep.subr.bf16.mxu0 0
        %566 = vmatpush1.bf16.msra.mxu0 %v521
        %567 = vmatprep.subr.bf16.mxu0 0
        %568 = vmatpush1.bf16.msra.mxu0 %v522
        %569 = vmatprep.subr.bf16.mxu0 0
        %570 = vmatpush1.bf16.msra.mxu0 %v523
        %571 = vmatprep.subr.bf16.mxu0 0
        %572 = vmatpush1.bf16.msra.mxu0 %v524
        %573 = vmatprep.mubr.bf16.mxu0 %v442
        %574 = vmatmul.mubr.bf16.gmra.mrb[0].mxu0 %v435
        %v575 = vpop.f32.mrb[0].mxu0
        %v576 = vadd.f32 %v418, %v575
        %v577 = vpop.f32.mrb[0].mxu0
        %v578 = vpop.f32.mrb[0].mxu0
        %v579 = vpop.f32.mrb[0].mxu0
        %580 = vdwg.mxu0
        %v581 = vmax.f32 %v576, 0.0
        %582 = vst [vmem:[%s371] sm:$0x3] %v581
        %s583 = sand.u32 %s117, 1
        %s584 = scalar_lea.sflag [#allocation4], %s583
        %s585 = sand.u32 %s117, 1
        %s586 = smul.addr %s585, 2
        %s587 = scalar_lea.vmem [#allocation3], %s586
        // Predicated region
        $region74: #{nature_cnn_encoder_forward.5} parent=68 // pred_check
          %p588 = pneg %p127
        $region75: #{nature_cnn_encoder_forward.5} parent=68 // pred_check_branch
          %590 = sbr.rel (%p588) target = $region77
        $region76: #{nature_cnn_encoder_forward.5} parent=68 // pred_region
          %s592 = ssub.s32 32, 32
          %593 = vsyncadd %s584, %s592
          %s594 = smul.addr %s21, 2
          %s595 = sadd.s32 %s22, %s594
          %s596 = smul.addr %s595, 32
          %s597 = scalar_lea.hbm %s3, %s596
          %s599 = sshll.u32 %s587, 4
          %s600 = int_to_ptr.vmem [resolvable:$true] %s599
          %602 = dma.vmem_to_hbm [thread:$0]  %s600, 32, %s597, %s584
        $region77: #{nature_cnn_encoder_forward.5} parent=68 // pred_fallthru
          _
      $region69: #{nature_cnn_encoder_forward.5} parent=5 // pred_fallthru
        _
      %p603 = scmp.le.s32.totalorder 2, %s12
      // Predicated region
      $region78: #{nature_cnn_encoder_forward.5} parent=5 // pred_check
        %p604 = pneg %p603
      $region79: #{nature_cnn_encoder_forward.5} parent=5 // pred_check_branch
        %606 = sbr.rel (%p604) target = $region81
      $region80: #{nature_cnn_encoder_forward.5} parent=5 // pred_region
        %s607 = ssub.s32 %s12, 2
        // Predicated region
        $region82: #{nature_cnn_encoder_forward.5} parent=80 // pred_check
          %p608 = pneg %p133
        $region83: #{nature_cnn_encoder_forward.5} parent=80 // pred_check_branch
          %610 = sbr.rel (%p608) target = $region85
        $region84: #{nature_cnn_encoder_forward.5} parent=80 // pred_region
          %s611 = sand.u32 %s118, 1
          %s612 = scalar_lea.sflag [#allocation4], %s611
          %s613 = sand.u32 %s118, 1
          %s614 = smul.addr %s613, 2
          %s615 = scalar_lea.vmem [#allocation3], %s614
          %616 = dma.done %s612, 32
        $region85: #{nature_cnn_encoder_forward.5} parent=80 // pred_fallthru
          _
      $region81: #{nature_cnn_encoder_forward.5} parent=5 // pred_fallthru
        _
    $region6: #{nature_cnn_encoder_forward.5} parent=1 // loop_footer
      %s16 = sadd.s32 1, %s12
    $region7: #{nature_cnn_encoder_forward.5} parent=1 // loop_footer_branch
      %11 = sbr.rel target = $region3
    $region8: #{nature_cnn_encoder_forward.5} parent=1 // loop_exit
      _
    %617 = vsyncpa [#allocation4], 1
    %s618 = scalar_lea.sflag [#allocation4], 1
    %619 = vsyncpa %s618, 1

</llo_original>
